<compile_context>
chip_gen: v5e
topology: v5e:2x2
jax: 0.10.0
libtpu: 0.0.40
codegen_flags: <defaults>
</compile_context>

<pallas_src>
import jax
import jax.numpy as jnp
from jax.experimental import pallas as pl
from jax.experimental.pallas import tpu as pltpu

K = 4          # kernel_size == stride, padding == 0
KK = K * K     # 16 taps per conv window
EPS = 1e-5     # PyTorch BatchNorm2d default


# ----------------------------------------------------------------------------
# Fused kernel: the whole Proj_Module forward in one grid step
# ----------------------------------------------------------------------------
def _fused_proj_kernel(p1_ref, w1_ref, s1_ref, w2_ref, s2_ref, w3_ref, s3_ref,
                       o_ref):
    """Layouts (transposed: big M dimension on lanes):
      p1_ref : (C0*16, M1) block-1 patches^T, lanes ordered (a2,b2,a3,b3,i3,j3,n)
      w1_ref : (C2, C0*16) BN-scale-folded conv1 weight, cols ordered (c0,kh,kw)
      w2_ref : (16*C2, C2) row block p=(a2,b2) holds scale2 * W2[:, :, a2, b2]
      w3_ref : (16*C3, C2) row block p=(a3,b3) holds scale3 * W3[:, :, a3, b3]
      s*_ref : (C, 1)      folded BN shift (includes conv bias)
      o_ref  : (C3, M3)    lanes ordered (i3, j3, n)
    Lane slice p (width M2) of y1 is exactly the block-2 patch column for tap
    (a2,b2)=p; lane slice p (width M3) of y2 is the block-3 patch column for
    tap (a3,b3)=p — so the conv chain is just matmuls + static lane slices,
    all resident in VMEM/vregs.
    """
    C2 = w1_ref.shape[0]
    C3 = o_ref.shape[0]
    M1 = p1_ref.shape[1]
    M2 = M1 // KK
    M3 = M2 // KK

    # ---- block 1: Conv(C0->C2) + BN + ReLU, one lane-dense MXU matmul ------
    y1 = jnp.dot(w1_ref[...], p1_ref[...], preferred_element_type=jnp.float32)
    y1 = jnp.maximum(y1 + s1_ref[...], 0.0)                     # (C2, M1)

    # ---- block 2: Conv(C2->C2) + BN + ReLU, sum over the 16 window taps ----
    # Static unrolled loop: 16 small MXU dots, no in-kernel relayout.
    acc2 = jnp.dot(w2_ref[0:C2, :], y1[:, 0:M2],
                   preferred_element_type=jnp.float32)
    for p in range(1, KK):
        acc2 = acc2 + jnp.dot(w2_ref[p * C2:(p + 1) * C2, :],
                              y1[:, p * M2:(p + 1) * M2],
                              preferred_element_type=jnp.float32)
    y2 = jnp.maximum(acc2 + s2_ref[...], 0.0)                   # (C2, M2)

    # ---- block 3: Conv(C2->C3) + BN + ReLU ---------------------------------
    acc3 = jnp.dot(w3_ref[0:C3, :], y2[:, 0:M3],
                   preferred_element_type=jnp.float32)
    for p in range(1, KK):
        acc3 = acc3 + jnp.dot(w3_ref[p * C3:(p + 1) * C3, :],
                              y2[:, p * M3:(p + 1) * M3],
                              preferred_element_type=jnp.float32)
    o_ref[...] = jnp.maximum(acc3 + s3_ref[...], 0.0)           # (C3, M3)


# ----------------------------------------------------------------------------
# Wrapper: fold BN, build the transposed patch matrix, call the fused kernel
# ----------------------------------------------------------------------------
def _fold_bn(w, b, gamma, beta, mean, var):
    scale = gamma / jnp.sqrt(var + EPS)
    shift = beta + (b - mean) * scale
    w_scaled = (w * scale[:, None, None, None]).astype(jnp.float32)
    return w_scaled, shift.astype(jnp.float32)


def proj_module_forward(x, all_params):
    """x: (N, C0, H, W) NCHW; H, W must be multiples of 64 (three /4 convs)."""
    N, C0, H, W = x.shape
    assert H % (K ** 3) == 0 and W % (K ** 3) == 0, (H, W)
    H3, W3 = H // K ** 3, W // K ** 3

    w1, b1, g1, bt1, m1, v1 = all_params["p1a"]
    w2, b2, g2, bt2, m2, v2 = all_params["p1b"]
    w3, b3, g3, bt3, m3, v3 = all_params["p2"]
    C2, C3 = w1.shape[0], w3.shape[0]

    # Fold BN (eval mode) + conv bias: scale into weights, shift stays additive.
    w1f, sh1 = _fold_bn(w1, b1, g1, bt1, m1, v1)
    w2f, sh2 = _fold_bn(w2, b2, g2, bt2, m2, v2)
    w3f, sh3 = _fold_bn(w3, b3, g3, bt3, m3, v3)

    w1_mat = w1f.reshape(C2, C0 * KK)                                # (C2, C0*16)
    w2_mat = jnp.transpose(w2f, (2, 3, 0, 1)).reshape(KK * C2, C2)   # (16*C2, C2)
    w3_mat = jnp.transpose(w3f, (2, 3, 0, 1)).reshape(KK * C3, C2)   # (16*C3, C2)

    # Transposed block-1 patch matrix.  Decompose h = 64*i3 + 16*a3 + 4*a2 + kh
    # (same for w) and order lanes as (a2, b2, a3, b3, i3, j3, n) so both
    # inter-block hand-offs are static lane slices inside the kernel.
    M3_ = H3 * W3 * N
    M2_ = KK * M3_
    M1_ = KK * M2_
    x10 = x.reshape(N, C0, H3, K, K, K, W3, K, K, K)
    #                n  c0  i3 a3 a2 kh  j3 b3 b2 kw
    p1t = jnp.transpose(x10, (1, 5, 9, 4, 8, 3, 7, 2, 6, 0))
    p1t = p1t.reshape(C0 * KK, M1_).astype(jnp.float32)

    sh1c = sh1.reshape(C2, 1)
    sh2c = sh2.reshape(C2, 1)
    sh3c = sh3.reshape(C3, 1)

    out = pl.pallas_call(
        _fused_proj_kernel,
        out_shape=jax.ShapeDtypeStruct((C3, M3_), jnp.float32),
        grid=(1,),
        in_specs=[
            pl.BlockSpec((C0 * KK, M1_), lambda i: (0, 0)),
            pl.BlockSpec((C2, C0 * KK), lambda i: (0, 0)),
            pl.BlockSpec((C2, 1), lambda i: (0, 0)),
            pl.BlockSpec((KK * C2, C2), lambda i: (0, 0)),
            pl.BlockSpec((C2, 1), lambda i: (0, 0)),
            pl.BlockSpec((KK * C3, C2), lambda i: (0, 0)),
            pl.BlockSpec((C3, 1), lambda i: (0, 0)),
        ],
        out_specs=pl.BlockSpec((C3, M3_), lambda i: (0, 0)),
        compiler_params=pltpu.CompilerParams(
            dimension_semantics=("arbitrary",)),
    )(p1t, w1_mat, sh1c, w2_mat, sh2c, w3_mat, sh3c)

    # (C3, M3) with lanes ordered (i3, j3, n) -> NCHW
    out = out.reshape(C3, H3, W3, N)
    return jnp.transpose(out, (3, 0, 1, 2))


# ----------------------------------------------------------------------------
# Deterministic parameter construction + pure-JAX reference
# ----------------------------------------------------------------------------
def make_block_params(key, cin, cout, k):
    k1, k2, k3, k4, k5, k6 = jax.random.split(key, 6)
    w = 0.1 * jax.random.normal(k1, (cout, cin, k, k), jnp.float32)
    b = 0.05 * jax.random.normal(k2, (cout,), jnp.float32)
    gamma = 1.0 + 0.1 * jax.random.normal(k3, (cout,), jnp.float32)
    beta = 0.1 * jax.random.normal(k4, (cout,), jnp.float32)
    mean = 0.1 * jax.random.normal(k5, (cout,), jnp.float32)
    var = jnp.abs(1.0 + 0.1 * jax.random.normal(k6, (cout,), jnp.float32))
    return (w, b, gamma, beta, mean, var)


def _ref_block(x, params, k):
    w, b, gamma, beta, mean, var = params
    Co = w.shape[0]
    N, C, H, W = x.shape
    Ho, Wo = H // k, W // k
    xp = x.reshape(N, C, Ho, k, Wo, k)
    xp = jnp.transpose(xp, (0, 2, 4, 1, 3, 5)).reshape(N * Ho * Wo, C * k * k)
    y = xp @ w.reshape(Co, -1).T + b
    y = (y - mean) * (gamma / jnp.sqrt(var + EPS)) + beta
    y = jnp.maximum(y, 0.0)
    return jnp.transpose(y.reshape(N, Ho, Wo, Co), (0, 3, 1, 2))


def _ref_forward(x, all_params):
    h = _ref_block(x, all_params["p1a"], K)
    h = _ref_block(h, all_params["p1b"], K)
    return _ref_block(h, all_params["p2"], K)


if __name__ == "__main__":
    # params['feature_chns'] analogue: only indices 0, 2, 3 are used.
    ft_chns = [4, 8, 16, 32]

    key = jax.random.PRNGKey(0)
    kx, kp1, kp2, kp3 = jax.random.split(key, 4)

    # Smallest spatial size the module supports: 64 -> 16 -> 4 -> 1.
    x = jax.random.normal(kx, (2, ft_chns[0], 64, 64), jnp.float32)

    all_params = {
        "p1a": make_block_params(kp1, ft_chns[0], ft_chns[2], K),
        "p1b": make_block_params(kp2, ft_chns[2], ft_chns[2], K),
        "p2":  make_block_params(kp3, ft_chns[2], ft_chns[3], K),
    }

    fwd = jax.jit(proj_module_forward)
    out = jax.block_until_ready(fwd(x, all_params))

    ref = jax.block_until_ready(_ref_forward(x, all_params))
    assert out.shape == (2, ft_chns[3], 1, 1), out.shape
    assert jnp.allclose(out, ref, atol=1e-4, rtol=1e-4), float(
        jnp.max(jnp.abs(out - ref)))

    print("KERNEL_OK")
</pallas_src>

<mosaic_0001>
module attributes {stable_mosaic.version = 11 : i64} {
  func.func @_fused_proj_kernel(%arg0: i32, %arg1: memref<64x512xf32, #tpu.memory_space<vmem>>, %arg2: memref<16x64xf32, #tpu.memory_space<vmem>>, %arg3: memref<16x1xf32, #tpu.memory_space<vmem>>, %arg4: memref<256x16xf32, #tpu.memory_space<vmem>>, %arg5: memref<16x1xf32, #tpu.memory_space<vmem>>, %arg6: memref<512x16xf32, #tpu.memory_space<vmem>>, %arg7: memref<32x1xf32, #tpu.memory_space<vmem>>, %arg8: memref<32x2xf32, #tpu.memory_space<vmem>>) attributes {dimension_semantics = [#tpu.dimension_semantics<arbitrary>], iteration_bounds = array<i64: 1>, scalar_prefetch = 0 : i64, scratch_operands = 0 : i64, tpu.core_type = #tpu.core_type<tc>, window_params = [{pipeline_mode = #tpu.pipeline_mode<synchronous>, transform_indices = @transform_0, window_bounds = array<i64: 64, 512>}, {pipeline_mode = #tpu.pipeline_mode<synchronous>, transform_indices = @transform_1, window_bounds = array<i64: 16, 64>}, {pipeline_mode = #tpu.pipeline_mode<synchronous>, transform_indices = @transform_2, window_bounds = array<i64: 16, 1>}, {pipeline_mode = #tpu.pipeline_mode<synchronous>, transform_indices = @transform_3, window_bounds = array<i64: 256, 16>}, {pipeline_mode = #tpu.pipeline_mode<synchronous>, transform_indices = @transform_4, window_bounds = array<i64: 16, 1>}, {pipeline_mode = #tpu.pipeline_mode<synchronous>, transform_indices = @transform_5, window_bounds = array<i64: 512, 16>}, {pipeline_mode = #tpu.pipeline_mode<synchronous>, transform_indices = @transform_6, window_bounds = array<i64: 32, 1>}, {pipeline_mode = #tpu.pipeline_mode<synchronous>, transform_indices = @transform_7, window_bounds = array<i64: 32, 2>}]} {
    %c0 = arith.constant 0 : index
    %c0_0 = arith.constant 0 : index
    %0 = vector.load %arg2[%c0, %c0_0] : memref<16x64xf32, #tpu.memory_space<vmem>>, vector<16x64xf32>
    %c0_1 = arith.constant 0 : index
    %c0_2 = arith.constant 0 : index
    %1 = vector.load %arg1[%c0_1, %c0_2] : memref<64x512xf32, #tpu.memory_space<vmem>>, vector<64x512xf32>
    %cst = arith.constant dense<0.000000e+00> : vector<16x512xf32>
    %2 = tpu.matmul %0, %1, %cst {dimension_numbers = #tpu.dot_dimension_numbers<[1], [0], [0], [1], [0, 0, 1, 1], [], []>} : vector<16x64xf32>, vector<64x512xf32>, vector<16x512xf32> -> vector<16x512xf32>
    %c0_3 = arith.constant 0 : index
    %c0_4 = arith.constant 0 : index
    %3 = vector.load %arg3[%c0_3, %c0_4] : memref<16x1xf32, #tpu.memory_space<vmem>>, vector<16x1xf32>
    %4 = vector.broadcast %3 : vector<16x1xf32> to vector<16x512xf32>
    %5 = arith.addf %2, %4 : vector<16x512xf32>
    %cst_5 = arith.constant 0.000000e+00 : f32
    %6 = vector.broadcast %cst_5 : f32 to vector<16x512xf32>
    %7 = arith.maximumf %5, %6 : vector<16x512xf32>
    %c0_6 = arith.constant 0 : index
    %c0_7 = arith.constant 0 : index
    %8 = vector.load %arg4[%c0_6, %c0_7] : memref<256x16xf32, #tpu.memory_space<vmem>>, vector<16x16xf32>
    %9 = vector.extract_strided_slice %7 {offsets = [0, 0], sizes = [16, 32], strides = [1, 1]} : vector<16x512xf32> to vector<16x32xf32>
    %cst_8 = arith.constant dense<0.000000e+00> : vector<16x32xf32>
    %10 = tpu.matmul %8, %9, %cst_8 {dimension_numbers = #tpu.dot_dimension_numbers<[1], [0], [0], [1], [0, 0, 1, 1], [], []>} : vector<16x16xf32>, vector<16x32xf32>, vector<16x32xf32> -> vector<16x32xf32>
    %c16 = arith.constant 16 : index
    %c0_9 = arith.constant 0 : index
    %11 = vector.load %arg4[%c16, %c0_9] : memref<256x16xf32, #tpu.memory_space<vmem>>, vector<16x16xf32>
    %12 = vector.extract_strided_slice %7 {offsets = [0, 32], sizes = [16, 32], strides = [1, 1]} : vector<16x512xf32> to vector<16x32xf32>
    %cst_10 = arith.constant dense<0.000000e+00> : vector<16x32xf32>
    %13 = tpu.matmul %11, %12, %cst_10 {dimension_numbers = #tpu.dot_dimension_numbers<[1], [0], [0], [1], [0, 0, 1, 1], [], []>} : vector<16x16xf32>, vector<16x32xf32>, vector<16x32xf32> -> vector<16x32xf32>
    %14 = arith.addf %10, %13 : vector<16x32xf32>
    %c32 = arith.constant 32 : index
    %c0_11 = arith.constant 0 : index
    %15 = vector.load %arg4[%c32, %c0_11] : memref<256x16xf32, #tpu.memory_space<vmem>>, vector<16x16xf32>
    %16 = vector.extract_strided_slice %7 {offsets = [0, 64], sizes = [16, 32], strides = [1, 1]} : vector<16x512xf32> to vector<16x32xf32>
    %cst_12 = arith.constant dense<0.000000e+00> : vector<16x32xf32>
    %17 = tpu.matmul %15, %16, %cst_12 {dimension_numbers = #tpu.dot_dimension_numbers<[1], [0], [0], [1], [0, 0, 1, 1], [], []>} : vector<16x16xf32>, vector<16x32xf32>, vector<16x32xf32> -> vector<16x32xf32>
    %18 = arith.addf %14, %17 : vector<16x32xf32>
    %c48 = arith.constant 48 : index
    %c0_13 = arith.constant 0 : index
    %19 = vector.load %arg4[%c48, %c0_13] : memref<256x16xf32, #tpu.memory_space<vmem>>, vector<16x16xf32>
    %20 = vector.extract_strided_slice %7 {offsets = [0, 96], sizes = [16, 32], strides = [1, 1]} : vector<16x512xf32> to vector<16x32xf32>
    %cst_14 = arith.constant dense<0.000000e+00> : vector<16x32xf32>
    %21 = tpu.matmul %19, %20, %cst_14 {dimension_numbers = #tpu.dot_dimension_numbers<[1], [0], [0], [1], [0, 0, 1, 1], [], []>} : vector<16x16xf32>, vector<16x32xf32>, vector<16x32xf32> -> vector<16x32xf32>
    %22 = arith.addf %18, %21 : vector<16x32xf32>
    %c64 = arith.constant 64 : index
    %c0_15 = arith.constant 0 : index
    %23 = vector.load %arg4[%c64, %c0_15] : memref<256x16xf32, #tpu.memory_space<vmem>>, vector<16x16xf32>
    %24 = vector.extract_strided_slice %7 {offsets = [0, 128], sizes = [16, 32], strides = [1, 1]} : vector<16x512xf32> to vector<16x32xf32>
    %cst_16 = arith.constant dense<0.000000e+00> : vector<16x32xf32>
    %25 = tpu.matmul %23, %24, %cst_16 {dimension_numbers = #tpu.dot_dimension_numbers<[1], [0], [0], [1], [0, 0, 1, 1], [], []>} : vector<16x16xf32>, vector<16x32xf32>, vector<16x32xf32> -> vector<16x32xf32>
    %26 = arith.addf %22, %25 : vector<16x32xf32>
    %c80 = arith.constant 80 : index
    %c0_17 = arith.constant 0 : index
    %27 = vector.load %arg4[%c80, %c0_17] : memref<256x16xf32, #tpu.memory_space<vmem>>, vector<16x16xf32>
    %28 = vector.extract_strided_slice %7 {offsets = [0, 160], sizes = [16, 32], strides = [1, 1]} : vector<16x512xf32> to vector<16x32xf32>
    %cst_18 = arith.constant dense<0.000000e+00> : vector<16x32xf32>
    %29 = tpu.matmul %27, %28, %cst_18 {dimension_numbers = #tpu.dot_dimension_numbers<[1], [0], [0], [1], [0, 0, 1, 1], [], []>} : vector<16x16xf32>, vector<16x32xf32>, vector<16x32xf32> -> vector<16x32xf32>
    %30 = arith.addf %26, %29 : vector<16x32xf32>
    %c96 = arith.constant 96 : index
    %c0_19 = arith.constant 0 : index
    %31 = vector.load %arg4[%c96, %c0_19] : memref<256x16xf32, #tpu.memory_space<vmem>>, vector<16x16xf32>
    %32 = vector.extract_strided_slice %7 {offsets = [0, 192], sizes = [16, 32], strides = [1, 1]} : vector<16x512xf32> to vector<16x32xf32>
    %cst_20 = arith.constant dense<0.000000e+00> : vector<16x32xf32>
    %33 = tpu.matmul %31, %32, %cst_20 {dimension_numbers = #tpu.dot_dimension_numbers<[1], [0], [0], [1], [0, 0, 1, 1], [], []>} : vector<16x16xf32>, vector<16x32xf32>, vector<16x32xf32> -> vector<16x32xf32>
    %34 = arith.addf %30, %33 : vector<16x32xf32>
    %c112 = arith.constant 112 : index
    %c0_21 = arith.constant 0 : index
    %35 = vector.load %arg4[%c112, %c0_21] : memref<256x16xf32, #tpu.memory_space<vmem>>, vector<16x16xf32>
    %36 = vector.extract_strided_slice %7 {offsets = [0, 224], sizes = [16, 32], strides = [1, 1]} : vector<16x512xf32> to vector<16x32xf32>
    %cst_22 = arith.constant dense<0.000000e+00> : vector<16x32xf32>
    %37 = tpu.matmul %35, %36, %cst_22 {dimension_numbers = #tpu.dot_dimension_numbers<[1], [0], [0], [1], [0, 0, 1, 1], [], []>} : vector<16x16xf32>, vector<16x32xf32>, vector<16x32xf32> -> vector<16x32xf32>
    %38 = arith.addf %34, %37 : vector<16x32xf32>
    %c128 = arith.constant 128 : index
    %c0_23 = arith.constant 0 : index
    %39 = vector.load %arg4[%c128, %c0_23] : memref<256x16xf32, #tpu.memory_space<vmem>>, vector<16x16xf32>
    %40 = vector.extract_strided_slice %7 {offsets = [0, 256], sizes = [16, 32], strides = [1, 1]} : vector<16x512xf32> to vector<16x32xf32>
    %cst_24 = arith.constant dense<0.000000e+00> : vector<16x32xf32>
    %41 = tpu.matmul %39, %40, %cst_24 {dimension_numbers = #tpu.dot_dimension_numbers<[1], [0], [0], [1], [0, 0, 1, 1], [], []>} : vector<16x16xf32>, vector<16x32xf32>, vector<16x32xf32> -> vector<16x32xf32>
    %42 = arith.addf %38, %41 : vector<16x32xf32>
    %c144 = arith.constant 144 : index
    %c0_25 = arith.constant 0 : index
    %43 = vector.load %arg4[%c144, %c0_25] : memref<256x16xf32, #tpu.memory_space<vmem>>, vector<16x16xf32>
    %44 = vector.extract_strided_slice %7 {offsets = [0, 288], sizes = [16, 32], strides = [1, 1]} : vector<16x512xf32> to vector<16x32xf32>
    %cst_26 = arith.constant dense<0.000000e+00> : vector<16x32xf32>
    %45 = tpu.matmul %43, %44, %cst_26 {dimension_numbers = #tpu.dot_dimension_numbers<[1], [0], [0], [1], [0, 0, 1, 1], [], []>} : vector<16x16xf32>, vector<16x32xf32>, vector<16x32xf32> -> vector<16x32xf32>
    %46 = arith.addf %42, %45 : vector<16x32xf32>
    %c160 = arith.constant 160 : index
    %c0_27 = arith.constant 0 : index
    %47 = vector.load %arg4[%c160, %c0_27] : memref<256x16xf32, #tpu.memory_space<vmem>>, vector<16x16xf32>
    %48 = vector.extract_strided_slice %7 {offsets = [0, 320], sizes = [16, 32], strides = [1, 1]} : vector<16x512xf32> to vector<16x32xf32>
    %cst_28 = arith.constant dense<0.000000e+00> : vector<16x32xf32>
    %49 = tpu.matmul %47, %48, %cst_28 {dimension_numbers = #tpu.dot_dimension_numbers<[1], [0], [0], [1], [0, 0, 1, 1], [], []>} : vector<16x16xf32>, vector<16x32xf32>, vector<16x32xf32> -> vector<16x32xf32>
    %50 = arith.addf %46, %49 : vector<16x32xf32>
    %c176 = arith.constant 176 : index
    %c0_29 = arith.constant 0 : index
    %51 = vector.load %arg4[%c176, %c0_29] : memref<256x16xf32, #tpu.memory_space<vmem>>, vector<16x16xf32>
    %52 = vector.extract_strided_slice %7 {offsets = [0, 352], sizes = [16, 32], strides = [1, 1]} : vector<16x512xf32> to vector<16x32xf32>
    %cst_30 = arith.constant dense<0.000000e+00> : vector<16x32xf32>
    %53 = tpu.matmul %51, %52, %cst_30 {dimension_numbers = #tpu.dot_dimension_numbers<[1], [0], [0], [1], [0, 0, 1, 1], [], []>} : vector<16x16xf32>, vector<16x32xf32>, vector<16x32xf32> -> vector<16x32xf32>
    %54 = arith.addf %50, %53 : vector<16x32xf32>
    %c192 = arith.constant 192 : index
    %c0_31 = arith.constant 0 : index
    %55 = vector.load %arg4[%c192, %c0_31] : memref<256x16xf32, #tpu.memory_space<vmem>>, vector<16x16xf32>
    %56 = vector.extract_strided_slice %7 {offsets = [0, 384], sizes = [16, 32], strides = [1, 1]} : vector<16x512xf32> to vector<16x32xf32>
    %cst_32 = arith.constant dense<0.000000e+00> : vector<16x32xf32>
    %57 = tpu.matmul %55, %56, %cst_32 {dimension_numbers = #tpu.dot_dimension_numbers<[1], [0], [0], [1], [0, 0, 1, 1], [], []>} : vector<16x16xf32>, vector<16x32xf32>, vector<16x32xf32> -> vector<16x32xf32>
    %58 = arith.addf %54, %57 : vector<16x32xf32>
    %c208 = arith.constant 208 : index
    %c0_33 = arith.constant 0 : index
    %59 = vector.load %arg4[%c208, %c0_33] : memref<256x16xf32, #tpu.memory_space<vmem>>, vector<16x16xf32>
    %60 = vector.extract_strided_slice %7 {offsets = [0, 416], sizes = [16, 32], strides = [1, 1]} : vector<16x512xf32> to vector<16x32xf32>
    %cst_34 = arith.constant dense<0.000000e+00> : vector<16x32xf32>
    %61 = tpu.matmul %59, %60, %cst_34 {dimension_numbers = #tpu.dot_dimension_numbers<[1], [0], [0], [1], [0, 0, 1, 1], [], []>} : vector<16x16xf32>, vector<16x32xf32>, vector<16x32xf32> -> vector<16x32xf32>
    %62 = arith.addf %58, %61 : vector<16x32xf32>
    %c224 = arith.constant 224 : index
    %c0_35 = arith.constant 0 : index
    %63 = vector.load %arg4[%c224, %c0_35] : memref<256x16xf32, #tpu.memory_space<vmem>>, vector<16x16xf32>
    %64 = vector.extract_strided_slice %7 {offsets = [0, 448], sizes = [16, 32], strides = [1, 1]} : vector<16x512xf32> to vector<16x32xf32>
    %cst_36 = arith.constant dense<0.000000e+00> : vector<16x32xf32>
    %65 = tpu.matmul %63, %64, %cst_36 {dimension_numbers = #tpu.dot_dimension_numbers<[1], [0], [0], [1], [0, 0, 1, 1], [], []>} : vector<16x16xf32>, vector<16x32xf32>, vector<16x32xf32> -> vector<16x32xf32>
    %66 = arith.addf %62, %65 : vector<16x32xf32>
    %c240 = arith.constant 240 : index
    %c0_37 = arith.constant 0 : index
    %67 = vector.load %arg4[%c240, %c0_37] : memref<256x16xf32, #tpu.memory_space<vmem>>, vector<16x16xf32>
    %68 = vector.extract_strided_slice %7 {offsets = [0, 480], sizes = [16, 32], strides = [1, 1]} : vector<16x512xf32> to vector<16x32xf32>
    %cst_38 = arith.constant dense<0.000000e+00> : vector<16x32xf32>
    %69 = tpu.matmul %67, %68, %cst_38 {dimension_numbers = #tpu.dot_dimension_numbers<[1], [0], [0], [1], [0, 0, 1, 1], [], []>} : vector<16x16xf32>, vector<16x32xf32>, vector<16x32xf32> -> vector<16x32xf32>
    %70 = arith.addf %66, %69 : vector<16x32xf32>
    %c0_39 = arith.constant 0 : index
    %c0_40 = arith.constant 0 : index
    %71 = vector.load %arg5[%c0_39, %c0_40] : memref<16x1xf32, #tpu.memory_space<vmem>>, vector<16x1xf32>
    %72 = vector.broadcast %71 : vector<16x1xf32> to vector<16x32xf32>
    %73 = arith.addf %70, %72 : vector<16x32xf32>
    %cst_41 = arith.constant 0.000000e+00 : f32
    %74 = vector.broadcast %cst_41 : f32 to vector<16x32xf32>
    %75 = arith.maximumf %73, %74 : vector<16x32xf32>
    %c0_42 = arith.constant 0 : index
    %c0_43 = arith.constant 0 : index
    %76 = vector.load %arg6[%c0_42, %c0_43] : memref<512x16xf32, #tpu.memory_space<vmem>>, vector<32x16xf32>
    %77 = vector.extract_strided_slice %75 {offsets = [0, 0], sizes = [16, 2], strides = [1, 1]} : vector<16x32xf32> to vector<16x2xf32>
    %cst_44 = arith.constant dense<0.000000e+00> : vector<32x2xf32>
    %78 = tpu.matmul %76, %77, %cst_44 {dimension_numbers = #tpu.dot_dimension_numbers<[1], [0], [0], [1], [0, 0, 1, 1], [], []>} : vector<32x16xf32>, vector<16x2xf32>, vector<32x2xf32> -> vector<32x2xf32>
    %c32_45 = arith.constant 32 : index
    %c0_46 = arith.constant 0 : index
    %79 = vector.load %arg6[%c32_45, %c0_46] : memref<512x16xf32, #tpu.memory_space<vmem>>, vector<32x16xf32>
    %80 = vector.extract_strided_slice %75 {offsets = [0, 2], sizes = [16, 2], strides = [1, 1]} : vector<16x32xf32> to vector<16x2xf32>
    %cst_47 = arith.constant dense<0.000000e+00> : vector<32x2xf32>
    %81 = tpu.matmul %79, %80, %cst_47 {dimension_numbers = #tpu.dot_dimension_numbers<[1], [0], [0], [1], [0, 0, 1, 1], [], []>} : vector<32x16xf32>, vector<16x2xf32>, vector<32x2xf32> -> vector<32x2xf32>
    %82 = arith.addf %78, %81 : vector<32x2xf32>
    %c64_48 = arith.constant 64 : index
    %c0_49 = arith.constant 0 : index
    %83 = vector.load %arg6[%c64_48, %c0_49] : memref<512x16xf32, #tpu.memory_space<vmem>>, vector<32x16xf32>
    %84 = vector.extract_strided_slice %75 {offsets = [0, 4], sizes = [16, 2], strides = [1, 1]} : vector<16x32xf32> to vector<16x2xf32>
    %cst_50 = arith.constant dense<0.000000e+00> : vector<32x2xf32>
    %85 = tpu.matmul %83, %84, %cst_50 {dimension_numbers = #tpu.dot_dimension_numbers<[1], [0], [0], [1], [0, 0, 1, 1], [], []>} : vector<32x16xf32>, vector<16x2xf32>, vector<32x2xf32> -> vector<32x2xf32>
    %86 = arith.addf %82, %85 : vector<32x2xf32>
    %c96_51 = arith.constant 96 : index
    %c0_52 = arith.constant 0 : index
    %87 = vector.load %arg6[%c96_51, %c0_52] : memref<512x16xf32, #tpu.memory_space<vmem>>, vector<32x16xf32>
    %88 = vector.extract_strided_slice %75 {offsets = [0, 6], sizes = [16, 2], strides = [1, 1]} : vector<16x32xf32> to vector<16x2xf32>
    %cst_53 = arith.constant dense<0.000000e+00> : vector<32x2xf32>
    %89 = tpu.matmul %87, %88, %cst_53 {dimension_numbers = #tpu.dot_dimension_numbers<[1], [0], [0], [1], [0, 0, 1, 1], [], []>} : vector<32x16xf32>, vector<16x2xf32>, vector<32x2xf32> -> vector<32x2xf32>
    %90 = arith.addf %86, %89 : vector<32x2xf32>
    %c128_54 = arith.constant 128 : index
    %c0_55 = arith.constant 0 : index
    %91 = vector.load %arg6[%c128_54, %c0_55] : memref<512x16xf32, #tpu.memory_space<vmem>>, vector<32x16xf32>
    %92 = vector.extract_strided_slice %75 {offsets = [0, 8], sizes = [16, 2], strides = [1, 1]} : vector<16x32xf32> to vector<16x2xf32>
    %cst_56 = arith.constant dense<0.000000e+00> : vector<32x2xf32>
    %93 = tpu.matmul %91, %92, %cst_56 {dimension_numbers = #tpu.dot_dimension_numbers<[1], [0], [0], [1], [0, 0, 1, 1], [], []>} : vector<32x16xf32>, vector<16x2xf32>, vector<32x2xf32> -> vector<32x2xf32>
    %94 = arith.addf %90, %93 : vector<32x2xf32>
    %c160_57 = arith.constant 160 : index
    %c0_58 = arith.constant 0 : index
    %95 = vector.load %arg6[%c160_57, %c0_58] : memref<512x16xf32, #tpu.memory_space<vmem>>, vector<32x16xf32>
    %96 = vector.extract_strided_slice %75 {offsets = [0, 10], sizes = [16, 2], strides = [1, 1]} : vector<16x32xf32> to vector<16x2xf32>
    %cst_59 = arith.constant dense<0.000000e+00> : vector<32x2xf32>
    %97 = tpu.matmul %95, %96, %cst_59 {dimension_numbers = #tpu.dot_dimension_numbers<[1], [0], [0], [1], [0, 0, 1, 1], [], []>} : vector<32x16xf32>, vector<16x2xf32>, vector<32x2xf32> -> vector<32x2xf32>
    %98 = arith.addf %94, %97 : vector<32x2xf32>
    %c192_60 = arith.constant 192 : index
    %c0_61 = arith.constant 0 : index
    %99 = vector.load %arg6[%c192_60, %c0_61] : memref<512x16xf32, #tpu.memory_space<vmem>>, vector<32x16xf32>
    %100 = vector.extract_strided_slice %75 {offsets = [0, 12], sizes = [16, 2], strides = [1, 1]} : vector<16x32xf32> to vector<16x2xf32>
    %cst_62 = arith.constant dense<0.000000e+00> : vector<32x2xf32>
    %101 = tpu.matmul %99, %100, %cst_62 {dimension_numbers = #tpu.dot_dimension_numbers<[1], [0], [0], [1], [0, 0, 1, 1], [], []>} : vector<32x16xf32>, vector<16x2xf32>, vector<32x2xf32> -> vector<32x2xf32>
    %102 = arith.addf %98, %101 : vector<32x2xf32>
    %c224_63 = arith.constant 224 : index
    %c0_64 = arith.constant 0 : index
    %103 = vector.load %arg6[%c224_63, %c0_64] : memref<512x16xf32, #tpu.memory_space<vmem>>, vector<32x16xf32>
    %104 = vector.extract_strided_slice %75 {offsets = [0, 14], sizes = [16, 2], strides = [1, 1]} : vector<16x32xf32> to vector<16x2xf32>
    %cst_65 = arith.constant dense<0.000000e+00> : vector<32x2xf32>
    %105 = tpu.matmul %103, %104, %cst_65 {dimension_numbers = #tpu.dot_dimension_numbers<[1], [0], [0], [1], [0, 0, 1, 1], [], []>} : vector<32x16xf32>, vector<16x2xf32>, vector<32x2xf32> -> vector<32x2xf32>
    %106 = arith.addf %102, %105 : vector<32x2xf32>
    %c256 = arith.constant 256 : index
    %c0_66 = arith.constant 0 : index
    %107 = vector.load %arg6[%c256, %c0_66] : memref<512x16xf32, #tpu.memory_space<vmem>>, vector<32x16xf32>
    %108 = vector.extract_strided_slice %75 {offsets = [0, 16], sizes = [16, 2], strides = [1, 1]} : vector<16x32xf32> to vector<16x2xf32>
    %cst_67 = arith.constant dense<0.000000e+00> : vector<32x2xf32>
    %109 = tpu.matmul %107, %108, %cst_67 {dimension_numbers = #tpu.dot_dimension_numbers<[1], [0], [0], [1], [0, 0, 1, 1], [], []>} : vector<32x16xf32>, vector<16x2xf32>, vector<32x2xf32> -> vector<32x2xf32>
    %110 = arith.addf %106, %109 : vector<32x2xf32>
    %c288 = arith.constant 288 : index
    %c0_68 = arith.constant 0 : index
    %111 = vector.load %arg6[%c288, %c0_68] : memref<512x16xf32, #tpu.memory_space<vmem>>, vector<32x16xf32>
    %112 = vector.extract_strided_slice %75 {offsets = [0, 18], sizes = [16, 2], strides = [1, 1]} : vector<16x32xf32> to vector<16x2xf32>
    %cst_69 = arith.constant dense<0.000000e+00> : vector<32x2xf32>
    %113 = tpu.matmul %111, %112, %cst_69 {dimension_numbers = #tpu.dot_dimension_numbers<[1], [0], [0], [1], [0, 0, 1, 1], [], []>} : vector<32x16xf32>, vector<16x2xf32>, vector<32x2xf32> -> vector<32x2xf32>
    %114 = arith.addf %110, %113 : vector<32x2xf32>
    %c320 = arith.constant 320 : index
    %c0_70 = arith.constant 0 : index
    %115 = vector.load %arg6[%c320, %c0_70] : memref<512x16xf32, #tpu.memory_space<vmem>>, vector<32x16xf32>
    %116 = vector.extract_strided_slice %75 {offsets = [0, 20], sizes = [16, 2], strides = [1, 1]} : vector<16x32xf32> to vector<16x2xf32>
    %cst_71 = arith.constant dense<0.000000e+00> : vector<32x2xf32>
    %117 = tpu.matmul %115, %116, %cst_71 {dimension_numbers = #tpu.dot_dimension_numbers<[1], [0], [0], [1], [0, 0, 1, 1], [], []>} : vector<32x16xf32>, vector<16x2xf32>, vector<32x2xf32> -> vector<32x2xf32>
    %118 = arith.addf %114, %117 : vector<32x2xf32>
    %c352 = arith.constant 352 : index
    %c0_72 = arith.constant 0 : index
    %119 = vector.load %arg6[%c352, %c0_72] : memref<512x16xf32, #tpu.memory_space<vmem>>, vector<32x16xf32>
    %120 = vector.extract_strided_slice %75 {offsets = [0, 22], sizes = [16, 2], strides = [1, 1]} : vector<16x32xf32> to vector<16x2xf32>
    %cst_73 = arith.constant dense<0.000000e+00> : vector<32x2xf32>
    %121 = tpu.matmul %119, %120, %cst_73 {dimension_numbers = #tpu.dot_dimension_numbers<[1], [0], [0], [1], [0, 0, 1, 1], [], []>} : vector<32x16xf32>, vector<16x2xf32>, vector<32x2xf32> -> vector<32x2xf32>
    %122 = arith.addf %118, %121 : vector<32x2xf32>
    %c384 = arith.constant 384 : index
    %c0_74 = arith.constant 0 : index
    %123 = vector.load %arg6[%c384, %c0_74] : memref<512x16xf32, #tpu.memory_space<vmem>>, vector<32x16xf32>
    %124 = vector.extract_strided_slice %75 {offsets = [0, 24], sizes = [16, 2], strides = [1, 1]} : vector<16x32xf32> to vector<16x2xf32>
    %cst_75 = arith.constant dense<0.000000e+00> : vector<32x2xf32>
    %125 = tpu.matmul %123, %124, %cst_75 {dimension_numbers = #tpu.dot_dimension_numbers<[1], [0], [0], [1], [0, 0, 1, 1], [], []>} : vector<32x16xf32>, vector<16x2xf32>, vector<32x2xf32> -> vector<32x2xf32>
    %126 = arith.addf %122, %125 : vector<32x2xf32>
    %c416 = arith.constant 416 : index
    %c0_76 = arith.constant 0 : index
    %127 = vector.load %arg6[%c416, %c0_76] : memref<512x16xf32, #tpu.memory_space<vmem>>, vector<32x16xf32>
    %128 = vector.extract_strided_slice %75 {offsets = [0, 26], sizes = [16, 2], strides = [1, 1]} : vector<16x32xf32> to vector<16x2xf32>
    %cst_77 = arith.constant dense<0.000000e+00> : vector<32x2xf32>
    %129 = tpu.matmul %127, %128, %cst_77 {dimension_numbers = #tpu.dot_dimension_numbers<[1], [0], [0], [1], [0, 0, 1, 1], [], []>} : vector<32x16xf32>, vector<16x2xf32>, vector<32x2xf32> -> vector<32x2xf32>
    %130 = arith.addf %126, %129 : vector<32x2xf32>
    %c448 = arith.constant 448 : index
    %c0_78 = arith.constant 0 : index
    %131 = vector.load %arg6[%c448, %c0_78] : memref<512x16xf32, #tpu.memory_space<vmem>>, vector<32x16xf32>
    %132 = vector.extract_strided_slice %75 {offsets = [0, 28], sizes = [16, 2], strides = [1, 1]} : vector<16x32xf32> to vector<16x2xf32>
    %cst_79 = arith.constant dense<0.000000e+00> : vector<32x2xf32>
    %133 = tpu.matmul %131, %132, %cst_79 {dimension_numbers = #tpu.dot_dimension_numbers<[1], [0], [0], [1], [0, 0, 1, 1], [], []>} : vector<32x16xf32>, vector<16x2xf32>, vector<32x2xf32> -> vector<32x2xf32>
    %134 = arith.addf %130, %133 : vector<32x2xf32>
    %c480 = arith.constant 480 : index
    %c0_80 = arith.constant 0 : index
    %135 = vector.load %arg6[%c480, %c0_80] : memref<512x16xf32, #tpu.memory_space<vmem>>, vector<32x16xf32>
    %136 = vector.extract_strided_slice %75 {offsets = [0, 30], sizes = [16, 2], strides = [1, 1]} : vector<16x32xf32> to vector<16x2xf32>
    %cst_81 = arith.constant dense<0.000000e+00> : vector<32x2xf32>
    %137 = tpu.matmul %135, %136, %cst_81 {dimension_numbers = #tpu.dot_dimension_numbers<[1], [0], [0], [1], [0, 0, 1, 1], [], []>} : vector<32x16xf32>, vector<16x2xf32>, vector<32x2xf32> -> vector<32x2xf32>
    %138 = arith.addf %134, %137 : vector<32x2xf32>
    %c0_82 = arith.constant 0 : index
    %c0_83 = arith.constant 0 : index
    %139 = vector.load %arg7[%c0_82, %c0_83] : memref<32x1xf32, #tpu.memory_space<vmem>>, vector<32x1xf32>
    %140 = vector.broadcast %139 : vector<32x1xf32> to vector<32x2xf32>
    %141 = arith.addf %138, %140 : vector<32x2xf32>
    %cst_84 = arith.constant 0.000000e+00 : f32
    %142 = vector.broadcast %cst_84 : f32 to vector<32x2xf32>
    %143 = arith.maximumf %141, %142 : vector<32x2xf32>
    %c0_85 = arith.constant 0 : index
    %c0_86 = arith.constant 0 : index
    %144 = vector.load %arg8[%c0_85, %c0_86] : memref<32x2xf32, #tpu.memory_space<vmem>>, vector<32x2xf32>
    tpu.vector_store %arg8[%c0_85, %c0_86], %143 {strides = array<i32>} : memref<32x2xf32, #tpu.memory_space<vmem>>, vector<32x2xf32>,
    return
  }
  func.func @transform_0(%arg0: i32) -> (i32, i32) {
    %c0_i32 = arith.constant 0 : i32
    %c0_i32_0 = arith.constant 0 : i32
    %c0_i32_1 = arith.constant 0 : i32
    return %c0_i32, %c0_i32_0 : i32, i32
  }
  func.func @transform_1(%arg0: i32) -> (i32, i32) {
    %c0_i32 = arith.constant 0 : i32
    %c0_i32_0 = arith.constant 0 : i32
    %c0_i32_1 = arith.constant 0 : i32
    return %c0_i32, %c0_i32_0 : i32, i32
  }
  func.func @transform_2(%arg0: i32) -> (i32, i32) {
    %c0_i32 = arith.constant 0 : i32
    %c0_i32_0 = arith.constant 0 : i32
    %c0_i32_1 = arith.constant 0 : i32
    return %c0_i32, %c0_i32_0 : i32, i32
  }
  func.func @transform_3(%arg0: i32) -> (i32, i32) {
    %c0_i32 = arith.constant 0 : i32
    %c0_i32_0 = arith.constant 0 : i32
    %c0_i32_1 = arith.constant 0 : i32
    return %c0_i32, %c0_i32_0 : i32, i32
  }
  func.func @transform_4(%arg0: i32) -> (i32, i32) {
    %c0_i32 = arith.constant 0 : i32
    %c0_i32_0 = arith.constant 0 : i32
    %c0_i32_1 = arith.constant 0 : i32
    return %c0_i32, %c0_i32_0 : i32, i32
  }
  func.func @transform_5(%arg0: i32) -> (i32, i32) {
    %c0_i32 = arith.constant 0 : i32
    %c0_i32_0 = arith.constant 0 : i32
    %c0_i32_1 = arith.constant 0 : i32
    return %c0_i32, %c0_i32_0 : i32, i32
  }
  func.func @transform_6(%arg0: i32) -> (i32, i32) {
    %c0_i32 = arith.constant 0 : i32
    %c0_i32_0 = arith.constant 0 : i32
    %c0_i32_1 = arith.constant 0 : i32
    return %c0_i32, %c0_i32_0 : i32, i32
  }
  func.func @transform_7(%arg0: i32) -> (i32, i32) {
    %c0_i32 = arith.constant 0 : i32
    %c0_i32_0 = arith.constant 0 : i32
    %c0_i32_1 = arith.constant 0 : i32
    return %c0_i32, %c0_i32_0 : i32, i32
  }
}

</mosaic_0001>

<llo_original>
// kernel: proj_module_forward.1
$region0: #{proj_module_forward.1}
  #allocation0 [shape = 'u32[]', space=smem, size = 0x4, offset = 0x4, fixed_abs, tag = 'smem constant byte address 0x4 - core index']
  #allocation1 [shape = 'u32[72,128]{1,0:T(1,128)}', space=vmem, size = 0x9000, scoped, tag = 'internal scratch']
  %s0 = inlined_call_operand.vmem [shape: f32[64,512], index: 0, kind: input, shape index: {}]
  %s1 = inlined_call_operand.vmem [shape: f32[16,64], index: 1, kind: input, shape index: {}]
  %s2 = inlined_call_operand.vmem [shape: f32[16,1], index: 2, kind: input, shape index: {}]
  %s3 = inlined_call_operand.vmem [shape: f32[256,16], index: 3, kind: input, shape index: {}]
  %s4 = inlined_call_operand.vmem [shape: f32[16,1], index: 4, kind: input, shape index: {}]
  %s5 = inlined_call_operand.vmem [shape: f32[512,16], index: 5, kind: input, shape index: {}]
  %s6 = inlined_call_operand.vmem [shape: f32[32,1], index: 6, kind: input, shape index: {}]
  %s7 = inlined_call_operand.vmem [shape: f32[32,2], index: 7, kind: output, shape index: {}]
  %s8 = sld [smem:[#allocation0]]
  $region38: #{proj_module_forward.1} parent=0
    _
  %s10 = ssub.s32 1, %s8
  %s11 = scalar_select 0, %s10, %s8
  // Predicated region
  $region2: #{proj_module_forward.1} parent=0 // pred_check
    _
  $region3: #{proj_module_forward.1} parent=0 // pred_check_branch
    %13 = sbr.rel (0) target = $region5
  $region4: #{proj_module_forward.1} parent=0 // pred_region
    _
  $region5: #{proj_module_forward.1} parent=0 // pred_fallthru
    _
  // Predicated region
  $region6: #{proj_module_forward.1} parent=0 // pred_check
    _
  $region7: #{proj_module_forward.1} parent=0 // pred_check_branch
    %15 = sbr.rel (0) target = $region9
  $region8: #{proj_module_forward.1} parent=0 // pred_region
    _
  $region9: #{proj_module_forward.1} parent=0 // pred_fallthru
    _
  // Predicated region
  $region10: #{proj_module_forward.1} parent=0 // pred_check
    _
  $region11: #{proj_module_forward.1} parent=0 // pred_check_branch
    %17 = sbr.rel (0) target = $region13
  $region12: #{proj_module_forward.1} parent=0 // pred_region
    _
  $region13: #{proj_module_forward.1} parent=0 // pred_fallthru
    _
  // Predicated region
  $region14: #{proj_module_forward.1} parent=0 // pred_check
    _
  $region15: #{proj_module_forward.1} parent=0 // pred_check_branch
    %19 = sbr.rel (0) target = $region17
  $region16: #{proj_module_forward.1} parent=0 // pred_region
    _
  $region17: #{proj_module_forward.1} parent=0 // pred_fallthru
    _
  // Predicated region
  $region18: #{proj_module_forward.1} parent=0 // pred_check
    _
  $region19: #{proj_module_forward.1} parent=0 // pred_check_branch
    %21 = sbr.rel (0) target = $region21
  $region20: #{proj_module_forward.1} parent=0 // pred_region
    _
  $region21: #{proj_module_forward.1} parent=0 // pred_fallthru
    _
  // Predicated region
  $region22: #{proj_module_forward.1} parent=0 // pred_check
    _
  $region23: #{proj_module_forward.1} parent=0 // pred_check_branch
    %23 = sbr.rel (0) target = $region25
  $region24: #{proj_module_forward.1} parent=0 // pred_region
    _
  $region25: #{proj_module_forward.1} parent=0 // pred_fallthru
    _
  // Predicated region
  $region26: #{proj_module_forward.1} parent=0 // pred_check
    _
  $region27: #{proj_module_forward.1} parent=0 // pred_check_branch
    %25 = sbr.rel (0) target = $region29
  $region28: #{proj_module_forward.1} parent=0 // pred_region
    _
  $region29: #{proj_module_forward.1} parent=0 // pred_fallthru
    _
  %v26 = vld [vmem:[%s1] sm:$0xff]
  %v27 = vld [vmem:[%s1 + $0x8] sm:$0xff]
  %v28 = vld [vmem:[%s0] sm:$0xff]
  %v29 = vld [vmem:[%s0 + $0x8] sm:$0xff]
  %v30 = vld [vmem:[%s0 + $0x10] sm:$0xff]
  %v31 = vld [vmem:[%s0 + $0x18] sm:$0xff]
  %v32 = vld [vmem:[%s0 + $0x20] sm:$0xff]
  %v33 = vld [vmem:[%s0 + $0x28] sm:$0xff]
  %v34 = vld [vmem:[%s0 + $0x30] sm:$0xff]
  %v35 = vld [vmem:[%s0 + $0x38] sm:$0xff]
  %v36 = vld [vmem:[%s0 + $0x40] sm:$0xff]
  %v37 = vld [vmem:[%s0 + $0x48] sm:$0xff]
  %v38 = vld [vmem:[%s0 + $0x50] sm:$0xff]
  %v39 = vld [vmem:[%s0 + $0x58] sm:$0xff]
  %v40 = vld [vmem:[%s0 + $0x60] sm:$0xff]
  %v41 = vld [vmem:[%s0 + $0x68] sm:$0xff]
  %v42 = vld [vmem:[%s0 + $0x70] sm:$0xff]
  %v43 = vld [vmem:[%s0 + $0x78] sm:$0xff]
  %v44 = vld [vmem:[%s0 + $0x80] sm:$0xff]
  %v45 = vld [vmem:[%s0 + $0x88] sm:$0xff]
  %v46 = vld [vmem:[%s0 + $0x90] sm:$0xff]
  %v47 = vld [vmem:[%s0 + $0x98] sm:$0xff]
  %v48 = vld [vmem:[%s0 + $0xa0] sm:$0xff]
  %v49 = vld [vmem:[%s0 + $0xa8] sm:$0xff]
  %v50 = vld [vmem:[%s0 + $0xb0] sm:$0xff]
  %v51 = vld [vmem:[%s0 + $0xb8] sm:$0xff]
  %v52 = vld [vmem:[%s0 + $0xc0] sm:$0xff]
  %v53 = vld [vmem:[%s0 + $0xc8] sm:$0xff]
  %v54 = vld [vmem:[%s0 + $0xd0] sm:$0xff]
  %v55 = vld [vmem:[%s0 + $0xd8] sm:$0xff]
  %v56 = vld [vmem:[%s0 + $0xe0] sm:$0xff]
  %v57 = vld [vmem:[%s0 + $0xe8] sm:$0xff]
  %v58 = vld [vmem:[%s0 + $0xf0] sm:$0xff]
  %v59 = vld [vmem:[%s0 + $0xf8] sm:$0xff]
  %v60 = vld [vmem:[%s2] sm:$0xff]
  %v61 = vld [vmem:[%s2 + $0x8] sm:$0xff]
  %63 = vset.pattern.permute.xlu0 0
  %64 = vperm.xlu0 %63, %v60
  %v65 = vpop.permute.xlu0 %64
  %68 = vset.pattern.permute.xlu0 0
  %69 = vperm.xlu0 %68, %v61
  %v70 = vpop.permute.xlu0 %69
  %vm72 = vcmask 523264
  %v74 = vsel %vm72, %v26, 0
  %v77 = vsel %vm72, %v27, 0
  %79 = vmatpush.msra.mxu0 0.0
  %80 = vmatpush.msra.mxu0 0.0
  %81 = vmatpush.msra.mxu0 0.0
  %82 = vmatpush.msra.mxu0 0.0
  %83 = vmatpush.msra.mxu0 0.0
  %84 = vmatpush.msra.mxu0 0.0
  %85 = vmatpush.msra.mxu0 0.0
  %86 = vmatpush.msra.mxu0 0.0
  %87 = vmatpush.msra.mxu0 %v56
  %88 = vmatpush.msra.mxu0 %v52
  %89 = vmatpush.msra.mxu0 %v48
  %90 = vmatpush.msra.mxu0 %v44
  %91 = vmatpush.msra.mxu0 %v40
  %92 = vmatpush.msra.mxu0 %v36
  %93 = vmatpush.msra.mxu0 %v32
  %94 = vmatpush.msra.mxu0 %v28
  %95 = vmatmul.f32.gmra.mxu0 %v74
  %v96 = vpop.f32.mrf.mxu0
  %v97 = vadd.f32 %v65, %v96
  %98 = vmatmul.f32.gmra.mxu0 %v77
  %v99 = vpop.f32.mrf.mxu0
  %v100 = vadd.f32 %v70, %v99
  %101 = vdwg.mxu0
  %102 = vmatpush.msra.mxu0 0.0
  %103 = vmatpush.msra.mxu0 0.0
  %104 = vmatpush.msra.mxu0 0.0
  %105 = vmatpush.msra.mxu0 0.0
  %106 = vmatpush.msra.mxu0 0.0
  %107 = vmatpush.msra.mxu0 0.0
  %108 = vmatpush.msra.mxu0 0.0
  %109 = vmatpush.msra.mxu0 0.0
  %110 = vmatpush.msra.mxu0 %v57
  %111 = vmatpush.msra.mxu0 %v53
  %112 = vmatpush.msra.mxu0 %v49
  %113 = vmatpush.msra.mxu0 %v45
  %114 = vmatpush.msra.mxu0 %v41
  %115 = vmatpush.msra.mxu0 %v37
  %116 = vmatpush.msra.mxu0 %v33
  %117 = vmatpush.msra.mxu0 %v29
  %118 = vmatmul.f32.gmra.mxu0 %v74
  %v119 = vpop.f32.mrf.mxu0
  %v120 = vadd.f32 %v65, %v119
  %121 = vmatmul.f32.gmra.mxu0 %v77
  %v122 = vpop.f32.mrf.mxu0
  %v123 = vadd.f32 %v70, %v122
  %124 = vdwg.mxu0
  %125 = vmatpush.msra.mxu0 0.0
  %126 = vmatpush.msra.mxu0 0.0
  %127 = vmatpush.msra.mxu0 0.0
  %128 = vmatpush.msra.mxu0 0.0
  %129 = vmatpush.msra.mxu0 0.0
  %130 = vmatpush.msra.mxu0 0.0
  %131 = vmatpush.msra.mxu0 0.0
  %132 = vmatpush.msra.mxu0 0.0
  %133 = vmatpush.msra.mxu0 %v58
  %134 = vmatpush.msra.mxu0 %v54
  %135 = vmatpush.msra.mxu0 %v50
  %136 = vmatpush.msra.mxu0 %v46
  %137 = vmatpush.msra.mxu0 %v42
  %138 = vmatpush.msra.mxu0 %v38
  %139 = vmatpush.msra.mxu0 %v34
  %140 = vmatpush.msra.mxu0 %v30
  %141 = vmatmul.f32.gmra.mxu0 %v74
  %v142 = vpop.f32.mrf.mxu0
  %v143 = vadd.f32 %v65, %v142
  %144 = vmatmul.f32.gmra.mxu0 %v77
  %v145 = vpop.f32.mrf.mxu0
  %v146 = vadd.f32 %v70, %v145
  %147 = vdwg.mxu0
  %148 = vmatpush.msra.mxu0 0.0
  %149 = vmatpush.msra.mxu0 0.0
  %150 = vmatpush.msra.mxu0 0.0
  %151 = vmatpush.msra.mxu0 0.0
  %152 = vmatpush.msra.mxu0 0.0
  %153 = vmatpush.msra.mxu0 0.0
  %154 = vmatpush.msra.mxu0 0.0
  %155 = vmatpush.msra.mxu0 0.0
  %156 = vmatpush.msra.mxu0 %v59
  %157 = vmatpush.msra.mxu0 %v55
  %158 = vmatpush.msra.mxu0 %v51
  %159 = vmatpush.msra.mxu0 %v47
  %160 = vmatpush.msra.mxu0 %v43
  %161 = vmatpush.msra.mxu0 %v39
  %162 = vmatpush.msra.mxu0 %v35
  %163 = vmatpush.msra.mxu0 %v31
  %164 = vmatmul.f32.gmra.mxu0 %v74
  %v165 = vpop.f32.mrf.mxu0
  %v166 = vadd.f32 %v65, %v165
  %167 = vmatmul.f32.gmra.mxu0 %v77
  %v168 = vpop.f32.mrf.mxu0
  %v169 = vadd.f32 %v70, %v168
  %170 = vdwg.mxu0
  %v171 = vmax.f32 %v97, 0.0
  %v172 = vmax.f32 %v120, 0.0
  %v173 = vmax.f32 %v143, 0.0
  %v174 = vmax.f32 %v166, 0.0
  %v175 = vmax.f32 %v100, 0.0
  %v176 = vmax.f32 %v123, 0.0
  %v177 = vmax.f32 %v146, 0.0
  %v178 = vmax.f32 %v169, 0.0
  %v179 = vld [vmem:[%s3] sm:$0xff]
  %v180 = vld [vmem:[%s3 + $0x8] sm:$0xff]
  %v181 = vld [vmem:[%s3 + $0x10] sm:$0xff]
  %v182 = vld [vmem:[%s3 + $0x18] sm:$0xff]
  %185 = vrot.lane.b32.xlu0 %v171, 96
  %v186 = vpop.permute.xlu0 %185
  %187 = vrot.lane.b32.xlu0 %v175, 96
  %v188 = vpop.permute.xlu0 %187
  %vm191 = vcmask 130048
  %v193 = vsel %vm191, %v181, 0
  %v196 = vsel %vm191, %v182, 0
  %198 = vmatpush.msra.mxu0 0.0
  %199 = vmatpush.msra.mxu0 0.0
  %200 = vmatpush.msra.mxu0 0.0
  %201 = vmatpush.msra.mxu0 0.0
  %202 = vmatpush.msra.mxu0 0.0
  %203 = vmatpush.msra.mxu0 0.0
  %204 = vmatpush.msra.mxu0 0.0
  %205 = vmatpush.msra.mxu0 0.0
  %206 = vmatpush.msra.mxu0 0.0
  %207 = vmatpush.msra.mxu0 0.0
  %208 = vmatpush.msra.mxu0 0.0
  %209 = vmatpush.msra.mxu0 0.0
  %210 = vmatpush.msra.mxu0 0.0
  %211 = vmatpush.msra.mxu0 0.0
  %212 = vmatpush.msra.mxu0 %v188
  %213 = vmatpush.msra.mxu0 %v186
  %214 = vmatmul.f32.gmra.mxu0 %v193
  %v215 = vpop.f32.mrf.mxu0
  %v216 = vadd.f32 0.0, %v215
  %217 = vmatmul.f32.gmra.mxu0 %v196
  %v218 = vpop.f32.mrf.mxu0
  %v219 = vadd.f32 0.0, %v218
  %220 = vdwg.mxu0
  %v222 = vsel %vm191, %v179, 0
  %v225 = vsel %vm191, %v180, 0
  %227 = vmatpush.msra.mxu0 0.0
  %228 = vmatpush.msra.mxu0 0.0
  %229 = vmatpush.msra.mxu0 0.0
  %230 = vmatpush.msra.mxu0 0.0
  %231 = vmatpush.msra.mxu0 0.0
  %232 = vmatpush.msra.mxu0 0.0
  %233 = vmatpush.msra.mxu0 0.0
  %234 = vmatpush.msra.mxu0 0.0
  %235 = vmatpush.msra.mxu0 0.0
  %236 = vmatpush.msra.mxu0 0.0
  %237 = vmatpush.msra.mxu0 0.0
  %238 = vmatpush.msra.mxu0 0.0
  %239 = vmatpush.msra.mxu0 0.0
  %240 = vmatpush.msra.mxu0 0.0
  %241 = vmatpush.msra.mxu0 %v175
  %242 = vmatpush.msra.mxu0 %v171
  %243 = vmatmul.f32.gmra.mxu0 %v222
  %v244 = vpop.f32.mrf.mxu0
  %v245 = vadd.f32 %v216, %v244
  %246 = vmatmul.f32.gmra.mxu0 %v225
  %v247 = vpop.f32.mrf.mxu0
  %v248 = vadd.f32 %v219, %v247
  %249 = vdwg.mxu0
  %v250 = vld [vmem:[%s3 + $0x20] sm:$0xff]
  %v251 = vld [vmem:[%s3 + $0x28] sm:$0xff]
  %252 = vrot.lane.b32.xlu0 %v171, 64
  %v253 = vpop.permute.xlu0 %252
  %254 = vrot.lane.b32.xlu0 %v175, 64
  %v255 = vpop.permute.xlu0 %254
  %v259 = vsel %vm191, %v250, 0
  %v262 = vsel %vm191, %v251, 0
  %264 = vmatpush.msra.mxu0 0.0
  %265 = vmatpush.msra.mxu0 0.0
  %266 = vmatpush.msra.mxu0 0.0
  %267 = vmatpush.msra.mxu0 0.0
  %268 = vmatpush.msra.mxu0 0.0
  %269 = vmatpush.msra.mxu0 0.0
  %270 = vmatpush.msra.mxu0 0.0
  %271 = vmatpush.msra.mxu0 0.0
  %272 = vmatpush.msra.mxu0 0.0
  %273 = vmatpush.msra.mxu0 0.0
  %274 = vmatpush.msra.mxu0 0.0
  %275 = vmatpush.msra.mxu0 0.0
  %276 = vmatpush.msra.mxu0 0.0
  %277 = vmatpush.msra.mxu0 0.0
  %278 = vmatpush.msra.mxu0 %v255
  %279 = vmatpush.msra.mxu0 %v253
  %280 = vmatmul.f32.gmra.mxu0 %v259
  %v281 = vpop.f32.mrf.mxu0
  %v282 = vadd.f32 0.0, %v281
  %283 = vmatmul.f32.gmra.mxu0 %v262
  %v284 = vpop.f32.mrf.mxu0
  %v285 = vadd.f32 0.0, %v284
  %286 = vdwg.mxu0
  %v287 = vadd.f32 %v245, %v282
  %v288 = vadd.f32 %v248, %v285
  %v289 = vld [vmem:[%s3 + $0x30] sm:$0xff]
  %v290 = vld [vmem:[%s3 + $0x38] sm:$0xff]
  %291 = vrot.lane.b32.xlu0 %v171, 32
  %v292 = vpop.permute.xlu0 %291
  %293 = vrot.lane.b32.xlu0 %v175, 32
  %v294 = vpop.permute.xlu0 %293
  %v298 = vsel %vm191, %v289, 0
  %v301 = vsel %vm191, %v290, 0
  %303 = vmatpush.msra.mxu0 0.0
  %304 = vmatpush.msra.mxu0 0.0
  %305 = vmatpush.msra.mxu0 0.0
  %306 = vmatpush.msra.mxu0 0.0
  %307 = vmatpush.msra.mxu0 0.0
  %308 = vmatpush.msra.mxu0 0.0
  %309 = vmatpush.msra.mxu0 0.0
  %310 = vmatpush.msra.mxu0 0.0
  %311 = vmatpush.msra.mxu0 0.0
  %312 = vmatpush.msra.mxu0 0.0
  %313 = vmatpush.msra.mxu0 0.0
  %314 = vmatpush.msra.mxu0 0.0
  %315 = vmatpush.msra.mxu0 0.0
  %316 = vmatpush.msra.mxu0 0.0
  %317 = vmatpush.msra.mxu0 %v294
  %318 = vmatpush.msra.mxu0 %v292
  %319 = vmatmul.f32.gmra.mxu0 %v298
  %v320 = vpop.f32.mrf.mxu0
  %v321 = vadd.f32 0.0, %v320
  %322 = vmatmul.f32.gmra.mxu0 %v301
  %v323 = vpop.f32.mrf.mxu0
  %v324 = vadd.f32 0.0, %v323
  %325 = vdwg.mxu0
  %v326 = vadd.f32 %v287, %v321
  %v327 = vadd.f32 %v288, %v324
  %v328 = vld [vmem:[%s3 + $0x40] sm:$0xff]
  %v329 = vld [vmem:[%s3 + $0x48] sm:$0xff]
  %v331 = vsel %vm191, %v328, 0
  %v334 = vsel %vm191, %v329, 0
  %336 = vmatpush.msra.mxu0 0.0
  %337 = vmatpush.msra.mxu0 0.0
  %338 = vmatpush.msra.mxu0 0.0
  %339 = vmatpush.msra.mxu0 0.0
  %340 = vmatpush.msra.mxu0 0.0
  %341 = vmatpush.msra.mxu0 0.0
  %342 = vmatpush.msra.mxu0 0.0
  %343 = vmatpush.msra.mxu0 0.0
  %344 = vmatpush.msra.mxu0 0.0
  %345 = vmatpush.msra.mxu0 0.0
  %346 = vmatpush.msra.mxu0 0.0
  %347 = vmatpush.msra.mxu0 0.0
  %348 = vmatpush.msra.mxu0 0.0
  %349 = vmatpush.msra.mxu0 0.0
  %350 = vmatpush.msra.mxu0 %v176
  %351 = vmatpush.msra.mxu0 %v172
  %352 = vmatmul.f32.gmra.mxu0 %v331
  %v353 = vpop.f32.mrf.mxu0
  %v354 = vadd.f32 0.0, %v353
  %355 = vmatmul.f32.gmra.mxu0 %v334
  %v356 = vpop.f32.mrf.mxu0
  %v357 = vadd.f32 0.0, %v356
  %358 = vdwg.mxu0
  %v359 = vadd.f32 %v326, %v354
  %v360 = vadd.f32 %v327, %v357
  %v361 = vld [vmem:[%s3 + $0x50] sm:$0xff]
  %v362 = vld [vmem:[%s3 + $0x58] sm:$0xff]
  %365 = vrot.lane.b32.xlu0 %v172, 96
  %v366 = vpop.permute.xlu0 %365
  %367 = vrot.lane.b32.xlu0 %v176, 96
  %v368 = vpop.permute.xlu0 %367
  %v372 = vsel %vm191, %v361, 0
  %v375 = vsel %vm191, %v362, 0
  %377 = vmatpush.msra.mxu0 0.0
  %378 = vmatpush.msra.mxu0 0.0
  %379 = vmatpush.msra.mxu0 0.0
  %380 = vmatpush.msra.mxu0 0.0
  %381 = vmatpush.msra.mxu0 0.0
  %382 = vmatpush.msra.mxu0 0.0
  %383 = vmatpush.msra.mxu0 0.0
  %384 = vmatpush.msra.mxu0 0.0
  %385 = vmatpush.msra.mxu0 0.0
  %386 = vmatpush.msra.mxu0 0.0
  %387 = vmatpush.msra.mxu0 0.0
  %388 = vmatpush.msra.mxu0 0.0
  %389 = vmatpush.msra.mxu0 0.0
  %390 = vmatpush.msra.mxu0 0.0
  %391 = vmatpush.msra.mxu0 %v368
  %392 = vmatpush.msra.mxu0 %v366
  %393 = vmatmul.f32.gmra.mxu0 %v372
  %v394 = vpop.f32.mrf.mxu0
  %v395 = vadd.f32 0.0, %v394
  %396 = vmatmul.f32.gmra.mxu0 %v375
  %v397 = vpop.f32.mrf.mxu0
  %v398 = vadd.f32 0.0, %v397
  %399 = vdwg.mxu0
  %v400 = vadd.f32 %v359, %v395
  %v401 = vadd.f32 %v360, %v398
  %v402 = vld [vmem:[%s3 + $0x60] sm:$0xff]
  %v403 = vld [vmem:[%s3 + $0x68] sm:$0xff]
  %404 = vrot.lane.b32.xlu0 %v172, 64
  %v405 = vpop.permute.xlu0 %404
  %406 = vrot.lane.b32.xlu0 %v176, 64
  %v407 = vpop.permute.xlu0 %406
  %v411 = vsel %vm191, %v402, 0
  %v414 = vsel %vm191, %v403, 0
  %416 = vmatpush.msra.mxu0 0.0
  %417 = vmatpush.msra.mxu0 0.0
  %418 = vmatpush.msra.mxu0 0.0
  %419 = vmatpush.msra.mxu0 0.0
  %420 = vmatpush.msra.mxu0 0.0
  %421 = vmatpush.msra.mxu0 0.0
  %422 = vmatpush.msra.mxu0 0.0
  %423 = vmatpush.msra.mxu0 0.0
  %424 = vmatpush.msra.mxu0 0.0
  %425 = vmatpush.msra.mxu0 0.0
  %426 = vmatpush.msra.mxu0 0.0
  %427 = vmatpush.msra.mxu0 0.0
  %428 = vmatpush.msra.mxu0 0.0
  %429 = vmatpush.msra.mxu0 0.0
  %430 = vmatpush.msra.mxu0 %v407
  %431 = vmatpush.msra.mxu0 %v405
  %432 = vmatmul.f32.gmra.mxu0 %v411
  %v433 = vpop.f32.mrf.mxu0
  %v434 = vadd.f32 0.0, %v433
  %435 = vmatmul.f32.gmra.mxu0 %v414
  %v436 = vpop.f32.mrf.mxu0
  %v437 = vadd.f32 0.0, %v436
  %438 = vdwg.mxu0
  %v439 = vadd.f32 %v400, %v434
  %v440 = vadd.f32 %v401, %v437
  %v441 = vld [vmem:[%s3 + $0x70] sm:$0xff]
  %v442 = vld [vmem:[%s3 + $0x78] sm:$0xff]
  %443 = vrot.lane.b32.xlu0 %v172, 32
  %v444 = vpop.permute.xlu0 %443
  %445 = vrot.lane.b32.xlu0 %v176, 32
  %v446 = vpop.permute.xlu0 %445
  %v450 = vsel %vm191, %v441, 0
  %v453 = vsel %vm191, %v442, 0
  %455 = vmatpush.msra.mxu0 0.0
  %456 = vmatpush.msra.mxu0 0.0
  %457 = vmatpush.msra.mxu0 0.0
  %458 = vmatpush.msra.mxu0 0.0
  %459 = vmatpush.msra.mxu0 0.0
  %460 = vmatpush.msra.mxu0 0.0
  %461 = vmatpush.msra.mxu0 0.0
  %462 = vmatpush.msra.mxu0 0.0
  %463 = vmatpush.msra.mxu0 0.0
  %464 = vmatpush.msra.mxu0 0.0
  %465 = vmatpush.msra.mxu0 0.0
  %466 = vmatpush.msra.mxu0 0.0
  %467 = vmatpush.msra.mxu0 0.0
  %468 = vmatpush.msra.mxu0 0.0
  %469 = vmatpush.msra.mxu0 %v446
  %470 = vmatpush.msra.mxu0 %v444
  %471 = vmatmul.f32.gmra.mxu0 %v450
  %v472 = vpop.f32.mrf.mxu0
  %v473 = vadd.f32 0.0, %v472
  %474 = vmatmul.f32.gmra.mxu0 %v453
  %v475 = vpop.f32.mrf.mxu0
  %v476 = vadd.f32 0.0, %v475
  %477 = vdwg.mxu0
  %v478 = vadd.f32 %v439, %v473
  %v479 = vadd.f32 %v440, %v476
  %v480 = vld [vmem:[%s3 + $0x80] sm:$0xff]
  %v481 = vld [vmem:[%s3 + $0x88] sm:$0xff]
  %v483 = vsel %vm191, %v480, 0
  %v486 = vsel %vm191, %v481, 0
  %488 = vmatpush.msra.mxu0 0.0
  %489 = vmatpush.msra.mxu0 0.0
  %490 = vmatpush.msra.mxu0 0.0
  %491 = vmatpush.msra.mxu0 0.0
  %492 = vmatpush.msra.mxu0 0.0
  %493 = vmatpush.msra.mxu0 0.0
  %494 = vmatpush.msra.mxu0 0.0
  %495 = vmatpush.msra.mxu0 0.0
  %496 = vmatpush.msra.mxu0 0.0
  %497 = vmatpush.msra.mxu0 0.0
  %498 = vmatpush.msra.mxu0 0.0
  %499 = vmatpush.msra.mxu0 0.0
  %500 = vmatpush.msra.mxu0 0.0
  %501 = vmatpush.msra.mxu0 0.0
  %502 = vmatpush.msra.mxu0 %v177
  %503 = vmatpush.msra.mxu0 %v173
  %504 = vmatmul.f32.gmra.mxu0 %v483
  %v505 = vpop.f32.mrf.mxu0
  %v506 = vadd.f32 0.0, %v505
  %507 = vmatmul.f32.gmra.mxu0 %v486
  %v508 = vpop.f32.mrf.mxu0
  %v509 = vadd.f32 0.0, %v508
  %510 = vdwg.mxu0
  %v511 = vadd.f32 %v478, %v506
  %v512 = vadd.f32 %v479, %v509
  %v513 = vld [vmem:[%s3 + $0x90] sm:$0xff]
  %v514 = vld [vmem:[%s3 + $0x98] sm:$0xff]
  %517 = vrot.lane.b32.xlu0 %v173, 96
  %v518 = vpop.permute.xlu0 %517
  %519 = vrot.lane.b32.xlu0 %v177, 96
  %v520 = vpop.permute.xlu0 %519
  %v524 = vsel %vm191, %v513, 0
  %v527 = vsel %vm191, %v514, 0
  %529 = vmatpush.msra.mxu0 0.0
  %530 = vmatpush.msra.mxu0 0.0
  %531 = vmatpush.msra.mxu0 0.0
  %532 = vmatpush.msra.mxu0 0.0
  %533 = vmatpush.msra.mxu0 0.0
  %534 = vmatpush.msra.mxu0 0.0
  %535 = vmatpush.msra.mxu0 0.0
  %536 = vmatpush.msra.mxu0 0.0
  %537 = vmatpush.msra.mxu0 0.0
  %538 = vmatpush.msra.mxu0 0.0
  %539 = vmatpush.msra.mxu0 0.0
  %540 = vmatpush.msra.mxu0 0.0
  %541 = vmatpush.msra.mxu0 0.0
  %542 = vmatpush.msra.mxu0 0.0
  %543 = vmatpush.msra.mxu0 %v520
  %544 = vmatpush.msra.mxu0 %v518
  %545 = vmatmul.f32.gmra.mxu0 %v524
  %v546 = vpop.f32.mrf.mxu0
  %v547 = vadd.f32 0.0, %v546
  %548 = vmatmul.f32.gmra.mxu0 %v527
  %v549 = vpop.f32.mrf.mxu0
  %v550 = vadd.f32 0.0, %v549
  %551 = vdwg.mxu0
  %v552 = vadd.f32 %v511, %v547
  %v553 = vadd.f32 %v512, %v550
  %v554 = vld [vmem:[%s3 + $0xa0] sm:$0xff]
  %v555 = vld [vmem:[%s3 + $0xa8] sm:$0xff]
  %556 = vrot.lane.b32.xlu0 %v173, 64
  %v557 = vpop.permute.xlu0 %556
  %558 = vrot.lane.b32.xlu0 %v177, 64
  %v559 = vpop.permute.xlu0 %558
  %v563 = vsel %vm191, %v554, 0
  %v566 = vsel %vm191, %v555, 0
  %568 = vmatpush.msra.mxu0 0.0
  %569 = vmatpush.msra.mxu0 0.0
  %570 = vmatpush.msra.mxu0 0.0
  %571 = vmatpush.msra.mxu0 0.0
  %572 = vmatpush.msra.mxu0 0.0
  %573 = vmatpush.msra.mxu0 0.0
  %574 = vmatpush.msra.mxu0 0.0
  %575 = vmatpush.msra.mxu0 0.0
  %576 = vmatpush.msra.mxu0 0.0
  %577 = vmatpush.msra.mxu0 0.0
  %578 = vmatpush.msra.mxu0 0.0
  %579 = vmatpush.msra.mxu0 0.0
  %580 = vmatpush.msra.mxu0 0.0
  %581 = vmatpush.msra.mxu0 0.0
  %582 = vmatpush.msra.mxu0 %v559
  %583 = vmatpush.msra.mxu0 %v557
  %584 = vmatmul.f32.gmra.mxu0 %v563
  %v585 = vpop.f32.mrf.mxu0
  %v586 = vadd.f32 0.0, %v585
  %587 = vmatmul.f32.gmra.mxu0 %v566
  %v588 = vpop.f32.mrf.mxu0
  %v589 = vadd.f32 0.0, %v588
  %590 = vdwg.mxu0
  %v591 = vadd.f32 %v552, %v586
  %v592 = vadd.f32 %v553, %v589
  %v593 = vld [vmem:[%s3 + $0xb0] sm:$0xff]
  %v594 = vld [vmem:[%s3 + $0xb8] sm:$0xff]
  %595 = vrot.lane.b32.xlu0 %v173, 32
  %v596 = vpop.permute.xlu0 %595
  %597 = vrot.lane.b32.xlu0 %v177, 32
  %v598 = vpop.permute.xlu0 %597
  %v602 = vsel %vm191, %v593, 0
  %v605 = vsel %vm191, %v594, 0
  %607 = vmatpush.msra.mxu0 0.0
  %608 = vmatpush.msra.mxu0 0.0
  %609 = vmatpush.msra.mxu0 0.0
  %610 = vmatpush.msra.mxu0 0.0
  %611 = vmatpush.msra.mxu0 0.0
  %612 = vmatpush.msra.mxu0 0.0
  %613 = vmatpush.msra.mxu0 0.0
  %614 = vmatpush.msra.mxu0 0.0
  %615 = vmatpush.msra.mxu0 0.0
  %616 = vmatpush.msra.mxu0 0.0
  %617 = vmatpush.msra.mxu0 0.0
  %618 = vmatpush.msra.mxu0 0.0
  %619 = vmatpush.msra.mxu0 0.0
  %620 = vmatpush.msra.mxu0 0.0
  %621 = vmatpush.msra.mxu0 %v598
  %622 = vmatpush.msra.mxu0 %v596
  %623 = vmatmul.f32.gmra.mxu0 %v602
  %v624 = vpop.f32.mrf.mxu0
  %v625 = vadd.f32 0.0, %v624
  %626 = vmatmul.f32.gmra.mxu0 %v605
  %v627 = vpop.f32.mrf.mxu0
  %v628 = vadd.f32 0.0, %v627
  %629 = vdwg.mxu0
  %v630 = vadd.f32 %v591, %v625
  %v631 = vadd.f32 %v592, %v628
  %v632 = vld [vmem:[%s3 + $0xc0] sm:$0xff]
  %v633 = vld [vmem:[%s3 + $0xc8] sm:$0xff]
  %v635 = vsel %vm191, %v632, 0
  %v638 = vsel %vm191, %v633, 0
  %640 = vmatpush.msra.mxu0 0.0
  %641 = vmatpush.msra.mxu0 0.0
  %642 = vmatpush.msra.mxu0 0.0
  %643 = vmatpush.msra.mxu0 0.0
  %644 = vmatpush.msra.mxu0 0.0
  %645 = vmatpush.msra.mxu0 0.0
  %646 = vmatpush.msra.mxu0 0.0
  %647 = vmatpush.msra.mxu0 0.0
  %648 = vmatpush.msra.mxu0 0.0
  %649 = vmatpush.msra.mxu0 0.0
  %650 = vmatpush.msra.mxu0 0.0
  %651 = vmatpush.msra.mxu0 0.0
  %652 = vmatpush.msra.mxu0 0.0
  %653 = vmatpush.msra.mxu0 0.0
  %654 = vmatpush.msra.mxu0 %v178
  %655 = vmatpush.msra.mxu0 %v174
  %656 = vmatmul.f32.gmra.mxu0 %v635
  %v657 = vpop.f32.mrf.mxu0
  %v658 = vadd.f32 0.0, %v657
  %659 = vmatmul.f32.gmra.mxu0 %v638
  %v660 = vpop.f32.mrf.mxu0
  %v661 = vadd.f32 0.0, %v660
  %662 = vdwg.mxu0
  %v663 = vadd.f32 %v630, %v658
  %v664 = vadd.f32 %v631, %v661
  %v665 = vld [vmem:[%s3 + $0xd0] sm:$0xff]
  %v666 = vld [vmem:[%s3 + $0xd8] sm:$0xff]
  %669 = vrot.lane.b32.xlu0 %v174, 96
  %v670 = vpop.permute.xlu0 %669
  %671 = vrot.lane.b32.xlu0 %v178, 96
  %v672 = vpop.permute.xlu0 %671
  %v676 = vsel %vm191, %v665, 0
  %v679 = vsel %vm191, %v666, 0
  %681 = vmatpush.msra.mxu0 0.0
  %682 = vmatpush.msra.mxu0 0.0
  %683 = vmatpush.msra.mxu0 0.0
  %684 = vmatpush.msra.mxu0 0.0
  %685 = vmatpush.msra.mxu0 0.0
  %686 = vmatpush.msra.mxu0 0.0
  %687 = vmatpush.msra.mxu0 0.0
  %688 = vmatpush.msra.mxu0 0.0
  %689 = vmatpush.msra.mxu0 0.0
  %690 = vmatpush.msra.mxu0 0.0
  %691 = vmatpush.msra.mxu0 0.0
  %692 = vmatpush.msra.mxu0 0.0
  %693 = vmatpush.msra.mxu0 0.0
  %694 = vmatpush.msra.mxu0 0.0
  %695 = vmatpush.msra.mxu0 %v672
  %696 = vmatpush.msra.mxu0 %v670
  %697 = vmatmul.f32.gmra.mxu0 %v676
  %v698 = vpop.f32.mrf.mxu0
  %v699 = vadd.f32 0.0, %v698
  %700 = vmatmul.f32.gmra.mxu0 %v679
  %v701 = vpop.f32.mrf.mxu0
  %v702 = vadd.f32 0.0, %v701
  %703 = vdwg.mxu0
  %v704 = vadd.f32 %v663, %v699
  %v705 = vadd.f32 %v664, %v702
  %v706 = vld [vmem:[%s3 + $0xe0] sm:$0xff]
  %v707 = vld [vmem:[%s3 + $0xe8] sm:$0xff]
  %708 = vrot.lane.b32.xlu0 %v174, 64
  %v709 = vpop.permute.xlu0 %708
  %710 = vrot.lane.b32.xlu0 %v178, 64
  %v711 = vpop.permute.xlu0 %710
  %v715 = vsel %vm191, %v706, 0
  %v718 = vsel %vm191, %v707, 0
  %720 = vmatpush.msra.mxu0 0.0
  %721 = vmatpush.msra.mxu0 0.0
  %722 = vmatpush.msra.mxu0 0.0
  %723 = vmatpush.msra.mxu0 0.0
  %724 = vmatpush.msra.mxu0 0.0
  %725 = vmatpush.msra.mxu0 0.0
  %726 = vmatpush.msra.mxu0 0.0
  %727 = vmatpush.msra.mxu0 0.0
  %728 = vmatpush.msra.mxu0 0.0
  %729 = vmatpush.msra.mxu0 0.0
  %730 = vmatpush.msra.mxu0 0.0
  %731 = vmatpush.msra.mxu0 0.0
  %732 = vmatpush.msra.mxu0 0.0
  %733 = vmatpush.msra.mxu0 0.0
  %734 = vmatpush.msra.mxu0 %v711
  %735 = vmatpush.msra.mxu0 %v709
  %736 = vmatmul.f32.gmra.mxu0 %v715
  %v737 = vpop.f32.mrf.mxu0
  %v738 = vadd.f32 0.0, %v737
  %739 = vmatmul.f32.gmra.mxu0 %v718
  %v740 = vpop.f32.mrf.mxu0
  %v741 = vadd.f32 0.0, %v740
  %742 = vdwg.mxu0
  %v743 = vadd.f32 %v704, %v738
  %v744 = vadd.f32 %v705, %v741
  %v745 = vld [vmem:[%s3 + $0xf0] sm:$0xff]
  %v746 = vld [vmem:[%s3 + $0xf8] sm:$0xff]
  %747 = vrot.lane.b32.xlu0 %v174, 32
  %v748 = vpop.permute.xlu0 %747
  %749 = vrot.lane.b32.xlu0 %v178, 32
  %v750 = vpop.permute.xlu0 %749
  %v754 = vsel %vm191, %v745, 0
  %v757 = vsel %vm191, %v746, 0
  %759 = vmatpush.msra.mxu0 0.0
  %760 = vmatpush.msra.mxu0 0.0
  %761 = vmatpush.msra.mxu0 0.0
  %762 = vmatpush.msra.mxu0 0.0
  %763 = vmatpush.msra.mxu0 0.0
  %764 = vmatpush.msra.mxu0 0.0
  %765 = vmatpush.msra.mxu0 0.0
  %766 = vmatpush.msra.mxu0 0.0
  %767 = vmatpush.msra.mxu0 0.0
  %768 = vmatpush.msra.mxu0 0.0
  %769 = vmatpush.msra.mxu0 0.0
  %770 = vmatpush.msra.mxu0 0.0
  %771 = vmatpush.msra.mxu0 0.0
  %772 = vmatpush.msra.mxu0 0.0
  %773 = vmatpush.msra.mxu0 %v750
  %774 = vmatpush.msra.mxu0 %v748
  %775 = vmatmul.f32.gmra.mxu0 %v754
  %v776 = vpop.f32.mrf.mxu0
  %v777 = vadd.f32 0.0, %v776
  %778 = vmatmul.f32.gmra.mxu0 %v757
  %v779 = vpop.f32.mrf.mxu0
  %v780 = vadd.f32 0.0, %v779
  %781 = vdwg.mxu0
  %v782 = vadd.f32 %v743, %v777
  %v783 = vadd.f32 %v744, %v780
  %v784 = vld [vmem:[%s4] sm:$0xff]
  %v785 = vld [vmem:[%s4 + $0x8] sm:$0xff]
  %787 = vset.pattern.permute.xlu0 0
  %788 = vperm.xlu0 %787, %v784
  %v789 = vpop.permute.xlu0 %788
  %792 = vset.pattern.permute.xlu0 0
  %793 = vperm.xlu0 %792, %v785
  %v794 = vpop.permute.xlu0 %793
  %v796 = vadd.f32 %v782, %v789
  %v797 = vadd.f32 %v783, %v794
  %v798 = vmax.f32 %v796, 0.0
  %v799 = vmax.f32 %v797, 0.0
  %v800 = vld [vmem:[%s5] sm:$0xff]
  %v801 = vld [vmem:[%s5 + $0x8] sm:$0xff]
  %v802 = vld [vmem:[%s5 + $0x10] sm:$0xff]
  %v803 = vld [vmem:[%s5 + $0x18] sm:$0xff]
  %v804 = vld [vmem:[%s5 + $0x20] sm:$0xff]
  %v805 = vld [vmem:[%s5 + $0x28] sm:$0xff]
  %v806 = vld [vmem:[%s5 + $0x30] sm:$0xff]
  %v807 = vld [vmem:[%s5 + $0x38] sm:$0xff]
  %810 = vrot.lane.b32.xlu0 %v798, 126
  %v811 = vpop.permute.xlu0 %810
  %812 = vrot.lane.b32.xlu0 %v799, 126
  %v813 = vpop.permute.xlu0 %812
  %v817 = vsel %vm191, %v804, 0
  %v820 = vsel %vm191, %v805, 0
  %v823 = vsel %vm191, %v806, 0
  %v826 = vsel %vm191, %v807, 0
  %828 = vmatpush.msra.mxu0 0.0
  %829 = vmatpush.msra.mxu0 0.0
  %830 = vmatpush.msra.mxu0 0.0
  %831 = vmatpush.msra.mxu0 0.0
  %832 = vmatpush.msra.mxu0 0.0
  %833 = vmatpush.msra.mxu0 0.0
  %834 = vmatpush.msra.mxu0 0.0
  %835 = vmatpush.msra.mxu0 0.0
  %836 = vmatpush.msra.mxu0 0.0
  %837 = vmatpush.msra.mxu0 0.0
  %838 = vmatpush.msra.mxu0 0.0
  %839 = vmatpush.msra.mxu0 0.0
  %840 = vmatpush.msra.mxu0 0.0
  %841 = vmatpush.msra.mxu0 0.0
  %842 = vmatpush.msra.mxu0 %v813
  %843 = vmatpush.msra.mxu0 %v811
  %844 = vmatmul.f32.gmra.mxu0 %v817
  %v845 = vpop.f32.mrf.mxu0
  %v846 = vadd.f32 0.0, %v845
  %847 = vmatmul.f32.gmra.mxu0 %v820
  %v848 = vpop.f32.mrf.mxu0
  %v849 = vadd.f32 0.0, %v848
  %850 = vmatmul.f32.gmra.mxu0 %v823
  %v851 = vpop.f32.mrf.mxu0
  %v852 = vadd.f32 0.0, %v851
  %853 = vmatmul.f32.gmra.mxu0 %v826
  %v854 = vpop.f32.mrf.mxu0
  %v855 = vadd.f32 0.0, %v854
  %856 = vdwg.mxu0
  %v858 = vsel %vm191, %v800, 0
  %v861 = vsel %vm191, %v801, 0
  %v864 = vsel %vm191, %v802, 0
  %v867 = vsel %vm191, %v803, 0
  %869 = vmatpush.msra.mxu0 0.0
  %870 = vmatpush.msra.mxu0 0.0
  %871 = vmatpush.msra.mxu0 0.0
  %872 = vmatpush.msra.mxu0 0.0
  %873 = vmatpush.msra.mxu0 0.0
  %874 = vmatpush.msra.mxu0 0.0
  %875 = vmatpush.msra.mxu0 0.0
  %876 = vmatpush.msra.mxu0 0.0
  %877 = vmatpush.msra.mxu0 0.0
  %878 = vmatpush.msra.mxu0 0.0
  %879 = vmatpush.msra.mxu0 0.0
  %880 = vmatpush.msra.mxu0 0.0
  %881 = vmatpush.msra.mxu0 0.0
  %882 = vmatpush.msra.mxu0 0.0
  %883 = vmatpush.msra.mxu0 %v799
  %884 = vmatpush.msra.mxu0 %v798
  %885 = vmatmul.f32.gmra.mxu0 %v858
  %v886 = vpop.f32.mrf.mxu0
  %v887 = vadd.f32 %v846, %v886
  %888 = vmatmul.f32.gmra.mxu0 %v861
  %v889 = vpop.f32.mrf.mxu0
  %v890 = vadd.f32 %v849, %v889
  %891 = vmatmul.f32.gmra.mxu0 %v864
  %v892 = vpop.f32.mrf.mxu0
  %v893 = vadd.f32 %v852, %v892
  %894 = vmatmul.f32.gmra.mxu0 %v867
  %v895 = vpop.f32.mrf.mxu0
  %v896 = vadd.f32 %v855, %v895
  %897 = vdwg.mxu0
  %v898 = vld [vmem:[%s5 + $0x40] sm:$0xff]
  %v899 = vld [vmem:[%s5 + $0x48] sm:$0xff]
  %v900 = vld [vmem:[%s5 + $0x50] sm:$0xff]
  %v901 = vld [vmem:[%s5 + $0x58] sm:$0xff]
  %902 = vrot.lane.b32.xlu0 %v798, 124
  %v903 = vpop.permute.xlu0 %902
  %904 = vrot.lane.b32.xlu0 %v799, 124
  %v905 = vpop.permute.xlu0 %904
  %v909 = vsel %vm191, %v898, 0
  %v912 = vsel %vm191, %v899, 0
  %v915 = vsel %vm191, %v900, 0
  %v918 = vsel %vm191, %v901, 0
  %920 = vmatpush.msra.mxu0 0.0
  %921 = vmatpush.msra.mxu0 0.0
  %922 = vmatpush.msra.mxu0 0.0
  %923 = vmatpush.msra.mxu0 0.0
  %924 = vmatpush.msra.mxu0 0.0
  %925 = vmatpush.msra.mxu0 0.0
  %926 = vmatpush.msra.mxu0 0.0
  %927 = vmatpush.msra.mxu0 0.0
  %928 = vmatpush.msra.mxu0 0.0
  %929 = vmatpush.msra.mxu0 0.0
  %930 = vmatpush.msra.mxu0 0.0
  %931 = vmatpush.msra.mxu0 0.0
  %932 = vmatpush.msra.mxu0 0.0
  %933 = vmatpush.msra.mxu0 0.0
  %934 = vmatpush.msra.mxu0 %v905
  %935 = vmatpush.msra.mxu0 %v903
  %936 = vmatmul.f32.gmra.mxu0 %v909
  %v937 = vpop.f32.mrf.mxu0
  %v938 = vadd.f32 0.0, %v937
  %939 = vmatmul.f32.gmra.mxu0 %v912
  %v940 = vpop.f32.mrf.mxu0
  %v941 = vadd.f32 0.0, %v940
  %942 = vmatmul.f32.gmra.mxu0 %v915
  %v943 = vpop.f32.mrf.mxu0
  %v944 = vadd.f32 0.0, %v943
  %945 = vmatmul.f32.gmra.mxu0 %v918
  %v946 = vpop.f32.mrf.mxu0
  %v947 = vadd.f32 0.0, %v946
  %948 = vdwg.mxu0
  %v949 = vadd.f32 %v887, %v938
  %v950 = vadd.f32 %v890, %v941
  %v951 = vadd.f32 %v893, %v944
  %v952 = vadd.f32 %v896, %v947
  %v953 = vld [vmem:[%s5 + $0x60] sm:$0xff]
  %v954 = vld [vmem:[%s5 + $0x68] sm:$0xff]
  %v955 = vld [vmem:[%s5 + $0x70] sm:$0xff]
  %v956 = vld [vmem:[%s5 + $0x78] sm:$0xff]
  %957 = vrot.lane.b32.xlu0 %v798, 122
  %v958 = vpop.permute.xlu0 %957
  %959 = vrot.lane.b32.xlu0 %v799, 122
  %v960 = vpop.permute.xlu0 %959
  %v964 = vsel %vm191, %v953, 0
  %v967 = vsel %vm191, %v954, 0
  %v970 = vsel %vm191, %v955, 0
  %v973 = vsel %vm191, %v956, 0
  %975 = vmatpush.msra.mxu0 0.0
  %976 = vmatpush.msra.mxu0 0.0
  %977 = vmatpush.msra.mxu0 0.0
  %978 = vmatpush.msra.mxu0 0.0
  %979 = vmatpush.msra.mxu0 0.0
  %980 = vmatpush.msra.mxu0 0.0
  %981 = vmatpush.msra.mxu0 0.0
  %982 = vmatpush.msra.mxu0 0.0
  %983 = vmatpush.msra.mxu0 0.0
  %984 = vmatpush.msra.mxu0 0.0
  %985 = vmatpush.msra.mxu0 0.0
  %986 = vmatpush.msra.mxu0 0.0
  %987 = vmatpush.msra.mxu0 0.0
  %988 = vmatpush.msra.mxu0 0.0
  %989 = vmatpush.msra.mxu0 %v960
  %990 = vmatpush.msra.mxu0 %v958
  %991 = vmatmul.f32.gmra.mxu0 %v964
  %v992 = vpop.f32.mrf.mxu0
  %v993 = vadd.f32 0.0, %v992
  %994 = vmatmul.f32.gmra.mxu0 %v967
  %v995 = vpop.f32.mrf.mxu0
  %v996 = vadd.f32 0.0, %v995
  %997 = vmatmul.f32.gmra.mxu0 %v970
  %v998 = vpop.f32.mrf.mxu0
  %v999 = vadd.f32 0.0, %v998
  %1000 = vmatmul.f32.gmra.mxu0 %v973
  %v1001 = vpop.f32.mrf.mxu0
  %v1002 = vadd.f32 0.0, %v1001
  %1003 = vdwg.mxu0
  %v1004 = vadd.f32 %v949, %v993
  %v1005 = vadd.f32 %v950, %v996
  %v1006 = vadd.f32 %v951, %v999
  %v1007 = vadd.f32 %v952, %v1002
  %v1008 = vld [vmem:[%s5 + $0x80] sm:$0xff]
  %v1009 = vld [vmem:[%s5 + $0x88] sm:$0xff]
  %v1010 = vld [vmem:[%s5 + $0x90] sm:$0xff]
  %v1011 = vld [vmem:[%s5 + $0x98] sm:$0xff]
  %1012 = vrot.lane.b32.xlu0 %v798, 120
  %v1013 = vpop.permute.xlu0 %1012
  %1014 = vrot.lane.b32.xlu0 %v799, 120
  %v1015 = vpop.permute.xlu0 %1014
  %v1019 = vsel %vm191, %v1008, 0
  %v1022 = vsel %vm191, %v1009, 0
  %v1025 = vsel %vm191, %v1010, 0
  %v1028 = vsel %vm191, %v1011, 0
  %1030 = vmatpush.msra.mxu0 0.0
  %1031 = vmatpush.msra.mxu0 0.0
  %1032 = vmatpush.msra.mxu0 0.0
  %1033 = vmatpush.msra.mxu0 0.0
  %1034 = vmatpush.msra.mxu0 0.0
  %1035 = vmatpush.msra.mxu0 0.0
  %1036 = vmatpush.msra.mxu0 0.0
  %1037 = vmatpush.msra.mxu0 0.0
  %1038 = vmatpush.msra.mxu0 0.0
  %1039 = vmatpush.msra.mxu0 0.0
  %1040 = vmatpush.msra.mxu0 0.0
  %1041 = vmatpush.msra.mxu0 0.0
  %1042 = vmatpush.msra.mxu0 0.0
  %1043 = vmatpush.msra.mxu0 0.0
  %1044 = vmatpush.msra.mxu0 %v1015
  %1045 = vmatpush.msra.mxu0 %v1013
  %1046 = vmatmul.f32.gmra.mxu0 %v1019
  %v1047 = vpop.f32.mrf.mxu0
  %v1048 = vadd.f32 0.0, %v1047
  %1049 = vmatmul.f32.gmra.mxu0 %v1022
  %v1050 = vpop.f32.mrf.mxu0
  %v1051 = vadd.f32 0.0, %v1050
  %1052 = vmatmul.f32.gmra.mxu0 %v1025
  %v1053 = vpop.f32.mrf.mxu0
  %v1054 = vadd.f32 0.0, %v1053
  %1055 = vmatmul.f32.gmra.mxu0 %v1028
  %v1056 = vpop.f32.mrf.mxu0
  %v1057 = vadd.f32 0.0, %v1056
  %1058 = vdwg.mxu0
  %v1059 = vadd.f32 %v1004, %v1048
  %v1060 = vadd.f32 %v1005, %v1051
  %v1061 = vadd.f32 %v1006, %v1054
  %v1062 = vadd.f32 %v1007, %v1057
  %v1063 = vld [vmem:[%s5 + $0xa0] sm:$0xff]
  %v1064 = vld [vmem:[%s5 + $0xa8] sm:$0xff]
  %v1065 = vld [vmem:[%s5 + $0xb0] sm:$0xff]
  %v1066 = vld [vmem:[%s5 + $0xb8] sm:$0xff]
  %1067 = vrot.lane.b32.xlu0 %v798, 118
  %v1068 = vpop.permute.xlu0 %1067
  %1069 = vrot.lane.b32.xlu0 %v799, 118
  %v1070 = vpop.permute.xlu0 %1069
  %v1074 = vsel %vm191, %v1063, 0
  %v1077 = vsel %vm191, %v1064, 0
  %v1080 = vsel %vm191, %v1065, 0
  %v1083 = vsel %vm191, %v1066, 0
  %1085 = vmatpush.msra.mxu0 0.0
  %1086 = vmatpush.msra.mxu0 0.0
  %1087 = vmatpush.msra.mxu0 0.0
  %1088 = vmatpush.msra.mxu0 0.0
  %1089 = vmatpush.msra.mxu0 0.0
  %1090 = vmatpush.msra.mxu0 0.0
  %1091 = vmatpush.msra.mxu0 0.0
  %1092 = vmatpush.msra.mxu0 0.0
  %1093 = vmatpush.msra.mxu0 0.0
  %1094 = vmatpush.msra.mxu0 0.0
  %1095 = vmatpush.msra.mxu0 0.0
  %1096 = vmatpush.msra.mxu0 0.0
  %1097 = vmatpush.msra.mxu0 0.0
  %1098 = vmatpush.msra.mxu0 0.0
  %1099 = vmatpush.msra.mxu0 %v1070
  %1100 = vmatpush.msra.mxu0 %v1068
  %1101 = vmatmul.f32.gmra.mxu0 %v1074
  %v1102 = vpop.f32.mrf.mxu0
  %v1103 = vadd.f32 0.0, %v1102
  %1104 = vmatmul.f32.gmra.mxu0 %v1077
  %v1105 = vpop.f32.mrf.mxu0
  %v1106 = vadd.f32 0.0, %v1105
  %1107 = vmatmul.f32.gmra.mxu0 %v1080
  %v1108 = vpop.f32.mrf.mxu0
  %v1109 = vadd.f32 0.0, %v1108
  %1110 = vmatmul.f32.gmra.mxu0 %v1083
  %v1111 = vpop.f32.mrf.mxu0
  %v1112 = vadd.f32 0.0, %v1111
  %1113 = vdwg.mxu0
  %v1114 = vadd.f32 %v1059, %v1103
  %v1115 = vadd.f32 %v1060, %v1106
  %v1116 = vadd.f32 %v1061, %v1109
  %v1117 = vadd.f32 %v1062, %v1112
  %v1118 = vld [vmem:[%s5 + $0xc0] sm:$0xff]
  %v1119 = vld [vmem:[%s5 + $0xc8] sm:$0xff]
  %v1120 = vld [vmem:[%s5 + $0xd0] sm:$0xff]
  %v1121 = vld [vmem:[%s5 + $0xd8] sm:$0xff]
  %1122 = vrot.lane.b32.xlu0 %v798, 116
  %v1123 = vpop.permute.xlu0 %1122
  %1124 = vrot.lane.b32.xlu0 %v799, 116
  %v1125 = vpop.permute.xlu0 %1124
  %v1129 = vsel %vm191, %v1118, 0
  %v1132 = vsel %vm191, %v1119, 0
  %v1135 = vsel %vm191, %v1120, 0
  %v1138 = vsel %vm191, %v1121, 0
  %1140 = vmatpush.msra.mxu0 0.0
  %1141 = vmatpush.msra.mxu0 0.0
  %1142 = vmatpush.msra.mxu0 0.0
  %1143 = vmatpush.msra.mxu0 0.0
  %1144 = vmatpush.msra.mxu0 0.0
  %1145 = vmatpush.msra.mxu0 0.0
  %1146 = vmatpush.msra.mxu0 0.0
  %1147 = vmatpush.msra.mxu0 0.0
  %1148 = vmatpush.msra.mxu0 0.0
  %1149 = vmatpush.msra.mxu0 0.0
  %1150 = vmatpush.msra.mxu0 0.0
  %1151 = vmatpush.msra.mxu0 0.0
  %1152 = vmatpush.msra.mxu0 0.0
  %1153 = vmatpush.msra.mxu0 0.0
  %1154 = vmatpush.msra.mxu0 %v1125
  %1155 = vmatpush.msra.mxu0 %v1123
  %1156 = vmatmul.f32.gmra.mxu0 %v1129
  %v1157 = vpop.f32.mrf.mxu0
  %v1158 = vadd.f32 0.0, %v1157
  %1159 = vmatmul.f32.gmra.mxu0 %v1132
  %v1160 = vpop.f32.mrf.mxu0
  %v1161 = vadd.f32 0.0, %v1160
  %1162 = vmatmul.f32.gmra.mxu0 %v1135
  %v1163 = vpop.f32.mrf.mxu0
  %v1164 = vadd.f32 0.0, %v1163
  %1165 = vmatmul.f32.gmra.mxu0 %v1138
  %v1166 = vpop.f32.mrf.mxu0
  %v1167 = vadd.f32 0.0, %v1166
  %1168 = vdwg.mxu0
  %v1169 = vadd.f32 %v1114, %v1158
  %v1170 = vadd.f32 %v1115, %v1161
  %v1171 = vadd.f32 %v1116, %v1164
  %v1172 = vadd.f32 %v1117, %v1167
  %v1173 = vld [vmem:[%s5 + $0xe0] sm:$0xff]
  %v1174 = vld [vmem:[%s5 + $0xe8] sm:$0xff]
  %v1175 = vld [vmem:[%s5 + $0xf0] sm:$0xff]
  %v1176 = vld [vmem:[%s5 + $0xf8] sm:$0xff]
  %1177 = vrot.lane.b32.xlu0 %v798, 114
  %v1178 = vpop.permute.xlu0 %1177
  %1179 = vrot.lane.b32.xlu0 %v799, 114
  %v1180 = vpop.permute.xlu0 %1179
  %v1184 = vsel %vm191, %v1173, 0
  %v1187 = vsel %vm191, %v1174, 0
  %v1190 = vsel %vm191, %v1175, 0
  %v1193 = vsel %vm191, %v1176, 0
  %1195 = vmatpush.msra.mxu0 0.0
  %1196 = vmatpush.msra.mxu0 0.0
  %1197 = vmatpush.msra.mxu0 0.0
  %1198 = vmatpush.msra.mxu0 0.0
  %1199 = vmatpush.msra.mxu0 0.0
  %1200 = vmatpush.msra.mxu0 0.0
  %1201 = vmatpush.msra.mxu0 0.0
  %1202 = vmatpush.msra.mxu0 0.0
  %1203 = vmatpush.msra.mxu0 0.0
  %1204 = vmatpush.msra.mxu0 0.0
  %1205 = vmatpush.msra.mxu0 0.0
  %1206 = vmatpush.msra.mxu0 0.0
  %1207 = vmatpush.msra.mxu0 0.0
  %1208 = vmatpush.msra.mxu0 0.0
  %1209 = vmatpush.msra.mxu0 %v1180
  %1210 = vmatpush.msra.mxu0 %v1178
  %1211 = vmatmul.f32.gmra.mxu0 %v1184
  %v1212 = vpop.f32.mrf.mxu0
  %v1213 = vadd.f32 0.0, %v1212
  %1214 = vmatmul.f32.gmra.mxu0 %v1187
  %v1215 = vpop.f32.mrf.mxu0
  %v1216 = vadd.f32 0.0, %v1215
  %1217 = vmatmul.f32.gmra.mxu0 %v1190
  %v1218 = vpop.f32.mrf.mxu0
  %v1219 = vadd.f32 0.0, %v1218
  %1220 = vmatmul.f32.gmra.mxu0 %v1193
  %v1221 = vpop.f32.mrf.mxu0
  %v1222 = vadd.f32 0.0, %v1221
  %1223 = vdwg.mxu0
  %v1224 = vadd.f32 %v1169, %v1213
  %v1225 = vadd.f32 %v1170, %v1216
  %v1226 = vadd.f32 %v1171, %v1219
  %v1227 = vadd.f32 %v1172, %v1222
  %v1228 = vld [vmem:[%s5 + $0x100] sm:$0xff]
  %v1229 = vld [vmem:[%s5 + $0x108] sm:$0xff]
  %v1230 = vld [vmem:[%s5 + $0x110] sm:$0xff]
  %v1231 = vld [vmem:[%s5 + $0x118] sm:$0xff]
  %1232 = vrot.lane.b32.xlu0 %v798, 112
  %v1233 = vpop.permute.xlu0 %1232
  %1234 = vrot.lane.b32.xlu0 %v799, 112
  %v1235 = vpop.permute.xlu0 %1234
  %v1239 = vsel %vm191, %v1228, 0
  %v1242 = vsel %vm191, %v1229, 0
  %v1245 = vsel %vm191, %v1230, 0
  %v1248 = vsel %vm191, %v1231, 0
  %1250 = vmatpush.msra.mxu0 0.0
  %1251 = vmatpush.msra.mxu0 0.0
  %1252 = vmatpush.msra.mxu0 0.0
  %1253 = vmatpush.msra.mxu0 0.0
  %1254 = vmatpush.msra.mxu0 0.0
  %1255 = vmatpush.msra.mxu0 0.0
  %1256 = vmatpush.msra.mxu0 0.0
  %1257 = vmatpush.msra.mxu0 0.0
  %1258 = vmatpush.msra.mxu0 0.0
  %1259 = vmatpush.msra.mxu0 0.0
  %1260 = vmatpush.msra.mxu0 0.0
  %1261 = vmatpush.msra.mxu0 0.0
  %1262 = vmatpush.msra.mxu0 0.0
  %1263 = vmatpush.msra.mxu0 0.0
  %1264 = vmatpush.msra.mxu0 %v1235
  %1265 = vmatpush.msra.mxu0 %v1233
  %1266 = vmatmul.f32.gmra.mxu0 %v1239
  %v1267 = vpop.f32.mrf.mxu0
  %v1268 = vadd.f32 0.0, %v1267
  %1269 = vmatmul.f32.gmra.mxu0 %v1242
  %v1270 = vpop.f32.mrf.mxu0
  %v1271 = vadd.f32 0.0, %v1270
  %1272 = vmatmul.f32.gmra.mxu0 %v1245
  %v1273 = vpop.f32.mrf.mxu0
  %v1274 = vadd.f32 0.0, %v1273
  %1275 = vmatmul.f32.gmra.mxu0 %v1248
  %v1276 = vpop.f32.mrf.mxu0
  %v1277 = vadd.f32 0.0, %v1276
  %1278 = vdwg.mxu0
  %v1279 = vadd.f32 %v1224, %v1268
  %v1280 = vadd.f32 %v1225, %v1271
  %v1281 = vadd.f32 %v1226, %v1274
  %v1282 = vadd.f32 %v1227, %v1277
  %v1283 = vld [vmem:[%s5 + $0x120] sm:$0xff]
  %v1284 = vld [vmem:[%s5 + $0x128] sm:$0xff]
  %v1285 = vld [vmem:[%s5 + $0x130] sm:$0xff]
  %v1286 = vld [vmem:[%s5 + $0x138] sm:$0xff]
  %1287 = vrot.lane.b32.xlu0 %v798, 110
  %v1288 = vpop.permute.xlu0 %1287
  %1289 = vrot.lane.b32.xlu0 %v799, 110
  %v1290 = vpop.permute.xlu0 %1289
  %v1294 = vsel %vm191, %v1283, 0
  %v1297 = vsel %vm191, %v1284, 0
  %v1300 = vsel %vm191, %v1285, 0
  %v1303 = vsel %vm191, %v1286, 0
  %1305 = vmatpush.msra.mxu0 0.0
  %1306 = vmatpush.msra.mxu0 0.0
  %1307 = vmatpush.msra.mxu0 0.0
  %1308 = vmatpush.msra.mxu0 0.0
  %1309 = vmatpush.msra.mxu0 0.0
  %1310 = vmatpush.msra.mxu0 0.0
  %1311 = vmatpush.msra.mxu0 0.0
  %1312 = vmatpush.msra.mxu0 0.0
  %1313 = vmatpush.msra.mxu0 0.0
  %1314 = vmatpush.msra.mxu0 0.0
  %1315 = vmatpush.msra.mxu0 0.0
  %1316 = vmatpush.msra.mxu0 0.0
  %1317 = vmatpush.msra.mxu0 0.0
  %1318 = vmatpush.msra.mxu0 0.0
  %1319 = vmatpush.msra.mxu0 %v1290
  %1320 = vmatpush.msra.mxu0 %v1288
  %1321 = vmatmul.f32.gmra.mxu0 %v1294
  %v1322 = vpop.f32.mrf.mxu0
  %v1323 = vadd.f32 0.0, %v1322
  %1324 = vmatmul.f32.gmra.mxu0 %v1297
  %v1325 = vpop.f32.mrf.mxu0
  %v1326 = vadd.f32 0.0, %v1325
  %1327 = vmatmul.f32.gmra.mxu0 %v1300
  %v1328 = vpop.f32.mrf.mxu0
  %v1329 = vadd.f32 0.0, %v1328
  %1330 = vmatmul.f32.gmra.mxu0 %v1303
  %v1331 = vpop.f32.mrf.mxu0
  %v1332 = vadd.f32 0.0, %v1331
  %1333 = vdwg.mxu0
  %v1334 = vadd.f32 %v1279, %v1323
  %v1335 = vadd.f32 %v1280, %v1326
  %v1336 = vadd.f32 %v1281, %v1329
  %v1337 = vadd.f32 %v1282, %v1332
  %v1338 = vld [vmem:[%s5 + $0x140] sm:$0xff]
  %v1339 = vld [vmem:[%s5 + $0x148] sm:$0xff]
  %v1340 = vld [vmem:[%s5 + $0x150] sm:$0xff]
  %v1341 = vld [vmem:[%s5 + $0x158] sm:$0xff]
  %1342 = vrot.lane.b32.xlu0 %v798, 108
  %v1343 = vpop.permute.xlu0 %1342
  %1344 = vrot.lane.b32.xlu0 %v799, 108
  %v1345 = vpop.permute.xlu0 %1344
  %v1349 = vsel %vm191, %v1338, 0
  %v1352 = vsel %vm191, %v1339, 0
  %v1355 = vsel %vm191, %v1340, 0
  %v1358 = vsel %vm191, %v1341, 0
  %1360 = vmatpush.msra.mxu0 0.0
  %1361 = vmatpush.msra.mxu0 0.0
  %1362 = vmatpush.msra.mxu0 0.0
  %1363 = vmatpush.msra.mxu0 0.0
  %1364 = vmatpush.msra.mxu0 0.0
  %1365 = vmatpush.msra.mxu0 0.0
  %1366 = vmatpush.msra.mxu0 0.0
  %1367 = vmatpush.msra.mxu0 0.0
  %1368 = vmatpush.msra.mxu0 0.0
  %1369 = vmatpush.msra.mxu0 0.0
  %1370 = vmatpush.msra.mxu0 0.0
  %1371 = vmatpush.msra.mxu0 0.0
  %1372 = vmatpush.msra.mxu0 0.0
  %1373 = vmatpush.msra.mxu0 0.0
  %1374 = vmatpush.msra.mxu0 %v1345
  %1375 = vmatpush.msra.mxu0 %v1343
  %1376 = vmatmul.f32.gmra.mxu0 %v1349
  %v1377 = vpop.f32.mrf.mxu0
  %v1378 = vadd.f32 0.0, %v1377
  %1379 = vmatmul.f32.gmra.mxu0 %v1352
  %v1380 = vpop.f32.mrf.mxu0
  %v1381 = vadd.f32 0.0, %v1380
  %1382 = vmatmul.f32.gmra.mxu0 %v1355
  %v1383 = vpop.f32.mrf.mxu0
  %v1384 = vadd.f32 0.0, %v1383
  %1385 = vmatmul.f32.gmra.mxu0 %v1358
  %v1386 = vpop.f32.mrf.mxu0
  %v1387 = vadd.f32 0.0, %v1386
  %1388 = vdwg.mxu0
  %v1389 = vadd.f32 %v1334, %v1378
  %v1390 = vadd.f32 %v1335, %v1381
  %v1391 = vadd.f32 %v1336, %v1384
  %v1392 = vadd.f32 %v1337, %v1387
  %v1393 = vld [vmem:[%s5 + $0x160] sm:$0xff]
  %v1394 = vld [vmem:[%s5 + $0x168] sm:$0xff]
  %v1395 = vld [vmem:[%s5 + $0x170] sm:$0xff]
  %v1396 = vld [vmem:[%s5 + $0x178] sm:$0xff]
  %1397 = vrot.lane.b32.xlu0 %v798, 106
  %v1398 = vpop.permute.xlu0 %1397
  %1399 = vrot.lane.b32.xlu0 %v799, 106
  %v1400 = vpop.permute.xlu0 %1399
  %v1404 = vsel %vm191, %v1393, 0
  %v1407 = vsel %vm191, %v1394, 0
  %v1410 = vsel %vm191, %v1395, 0
  %v1413 = vsel %vm191, %v1396, 0
  %1415 = vmatpush.msra.mxu0 0.0
  %1416 = vmatpush.msra.mxu0 0.0
  %1417 = vmatpush.msra.mxu0 0.0
  %1418 = vmatpush.msra.mxu0 0.0
  %1419 = vmatpush.msra.mxu0 0.0
  %1420 = vmatpush.msra.mxu0 0.0
  %1421 = vmatpush.msra.mxu0 0.0
  %1422 = vmatpush.msra.mxu0 0.0
  %1423 = vmatpush.msra.mxu0 0.0
  %1424 = vmatpush.msra.mxu0 0.0
  %1425 = vmatpush.msra.mxu0 0.0
  %1426 = vmatpush.msra.mxu0 0.0
  %1427 = vmatpush.msra.mxu0 0.0
  %1428 = vmatpush.msra.mxu0 0.0
  %1429 = vmatpush.msra.mxu0 %v1400
  %1430 = vmatpush.msra.mxu0 %v1398
  %1431 = vmatmul.f32.gmra.mxu0 %v1404
  %v1432 = vpop.f32.mrf.mxu0
  %v1433 = vadd.f32 0.0, %v1432
  %1434 = vmatmul.f32.gmra.mxu0 %v1407
  %v1435 = vpop.f32.mrf.mxu0
  %v1436 = vadd.f32 0.0, %v1435
  %1437 = vmatmul.f32.gmra.mxu0 %v1410
  %v1438 = vpop.f32.mrf.mxu0
  %v1439 = vadd.f32 0.0, %v1438
  %1440 = vmatmul.f32.gmra.mxu0 %v1413
  %v1441 = vpop.f32.mrf.mxu0
  %v1442 = vadd.f32 0.0, %v1441
  %1443 = vdwg.mxu0
  %v1444 = vadd.f32 %v1389, %v1433
  %v1445 = vadd.f32 %v1390, %v1436
  %v1446 = vadd.f32 %v1391, %v1439
  %v1447 = vadd.f32 %v1392, %v1442
  %v1448 = vld [vmem:[%s5 + $0x180] sm:$0xff]
  %v1449 = vld [vmem:[%s5 + $0x188] sm:$0xff]
  %v1450 = vld [vmem:[%s5 + $0x190] sm:$0xff]
  %v1451 = vld [vmem:[%s5 + $0x198] sm:$0xff]
  %1452 = vrot.lane.b32.xlu0 %v798, 104
  %v1453 = vpop.permute.xlu0 %1452
  %1454 = vrot.lane.b32.xlu0 %v799, 104
  %v1455 = vpop.permute.xlu0 %1454
  %v1459 = vsel %vm191, %v1448, 0
  %v1462 = vsel %vm191, %v1449, 0
  %v1465 = vsel %vm191, %v1450, 0
  %v1468 = vsel %vm191, %v1451, 0
  %1470 = vmatpush.msra.mxu0 0.0
  %1471 = vmatpush.msra.mxu0 0.0
  %1472 = vmatpush.msra.mxu0 0.0
  %1473 = vmatpush.msra.mxu0 0.0
  %1474 = vmatpush.msra.mxu0 0.0
  %1475 = vmatpush.msra.mxu0 0.0
  %1476 = vmatpush.msra.mxu0 0.0
  %1477 = vmatpush.msra.mxu0 0.0
  %1478 = vmatpush.msra.mxu0 0.0
  %1479 = vmatpush.msra.mxu0 0.0
  %1480 = vmatpush.msra.mxu0 0.0
  %1481 = vmatpush.msra.mxu0 0.0
  %1482 = vmatpush.msra.mxu0 0.0
  %1483 = vmatpush.msra.mxu0 0.0
  %1484 = vmatpush.msra.mxu0 %v1455
  %1485 = vmatpush.msra.mxu0 %v1453
  %1486 = vmatmul.f32.gmra.mxu0 %v1459
  %v1487 = vpop.f32.mrf.mxu0
  %v1488 = vadd.f32 0.0, %v1487
  %1489 = vmatmul.f32.gmra.mxu0 %v1462
  %v1490 = vpop.f32.mrf.mxu0
  %v1491 = vadd.f32 0.0, %v1490
  %1492 = vmatmul.f32.gmra.mxu0 %v1465
  %v1493 = vpop.f32.mrf.mxu0
  %v1494 = vadd.f32 0.0, %v1493
  %1495 = vmatmul.f32.gmra.mxu0 %v1468
  %v1496 = vpop.f32.mrf.mxu0
  %v1497 = vadd.f32 0.0, %v1496
  %1498 = vdwg.mxu0
  %v1499 = vadd.f32 %v1444, %v1488
  %v1500 = vadd.f32 %v1445, %v1491
  %v1501 = vadd.f32 %v1446, %v1494
  %v1502 = vadd.f32 %v1447, %v1497
  %v1503 = vld [vmem:[%s5 + $0x1a0] sm:$0xff]
  %v1504 = vld [vmem:[%s5 + $0x1a8] sm:$0xff]
  %v1505 = vld [vmem:[%s5 + $0x1b0] sm:$0xff]
  %v1506 = vld [vmem:[%s5 + $0x1b8] sm:$0xff]
  %1507 = vrot.lane.b32.xlu0 %v798, 102
  %v1508 = vpop.permute.xlu0 %1507
  %1509 = vrot.lane.b32.xlu0 %v799, 102
  %v1510 = vpop.permute.xlu0 %1509
  %v1514 = vsel %vm191, %v1503, 0
  %v1517 = vsel %vm191, %v1504, 0
  %v1520 = vsel %vm191, %v1505, 0
  %v1523 = vsel %vm191, %v1506, 0
  %1525 = vmatpush.msra.mxu0 0.0
  %1526 = vmatpush.msra.mxu0 0.0
  %1527 = vmatpush.msra.mxu0 0.0
  %1528 = vmatpush.msra.mxu0 0.0
  %1529 = vmatpush.msra.mxu0 0.0
  %1530 = vmatpush.msra.mxu0 0.0
  %1531 = vmatpush.msra.mxu0 0.0
  %1532 = vmatpush.msra.mxu0 0.0
  %1533 = vmatpush.msra.mxu0 0.0
  %1534 = vmatpush.msra.mxu0 0.0
  %1535 = vmatpush.msra.mxu0 0.0
  %1536 = vmatpush.msra.mxu0 0.0
  %1537 = vmatpush.msra.mxu0 0.0
  %1538 = vmatpush.msra.mxu0 0.0
  %1539 = vmatpush.msra.mxu0 %v1510
  %1540 = vmatpush.msra.mxu0 %v1508
  %1541 = vmatmul.f32.gmra.mxu0 %v1514
  %v1542 = vpop.f32.mrf.mxu0
  %v1543 = vadd.f32 0.0, %v1542
  %1544 = vmatmul.f32.gmra.mxu0 %v1517
  %v1545 = vpop.f32.mrf.mxu0
  %v1546 = vadd.f32 0.0, %v1545
  %1547 = vmatmul.f32.gmra.mxu0 %v1520
  %v1548 = vpop.f32.mrf.mxu0
  %v1549 = vadd.f32 0.0, %v1548
  %1550 = vmatmul.f32.gmra.mxu0 %v1523
  %v1551 = vpop.f32.mrf.mxu0
  %v1552 = vadd.f32 0.0, %v1551
  %1553 = vdwg.mxu0
  %v1554 = vadd.f32 %v1499, %v1543
  %v1555 = vadd.f32 %v1500, %v1546
  %v1556 = vadd.f32 %v1501, %v1549
  %v1557 = vadd.f32 %v1502, %v1552
  %v1558 = vld [vmem:[%s5 + $0x1c0] sm:$0xff]
  %v1559 = vld [vmem:[%s5 + $0x1c8] sm:$0xff]
  %v1560 = vld [vmem:[%s5 + $0x1d0] sm:$0xff]
  %v1561 = vld [vmem:[%s5 + $0x1d8] sm:$0xff]
  %1562 = vrot.lane.b32.xlu0 %v798, 100
  %v1563 = vpop.permute.xlu0 %1562
  %1564 = vrot.lane.b32.xlu0 %v799, 100
  %v1565 = vpop.permute.xlu0 %1564
  %v1569 = vsel %vm191, %v1558, 0
  %v1572 = vsel %vm191, %v1559, 0
  %v1575 = vsel %vm191, %v1560, 0
  %v1578 = vsel %vm191, %v1561, 0
  %1580 = vmatpush.msra.mxu0 0.0
  %1581 = vmatpush.msra.mxu0 0.0
  %1582 = vmatpush.msra.mxu0 0.0
  %1583 = vmatpush.msra.mxu0 0.0
  %1584 = vmatpush.msra.mxu0 0.0
  %1585 = vmatpush.msra.mxu0 0.0
  %1586 = vmatpush.msra.mxu0 0.0
  %1587 = vmatpush.msra.mxu0 0.0
  %1588 = vmatpush.msra.mxu0 0.0
  %1589 = vmatpush.msra.mxu0 0.0
  %1590 = vmatpush.msra.mxu0 0.0
  %1591 = vmatpush.msra.mxu0 0.0
  %1592 = vmatpush.msra.mxu0 0.0
  %1593 = vmatpush.msra.mxu0 0.0
  %1594 = vmatpush.msra.mxu0 %v1565
  %1595 = vmatpush.msra.mxu0 %v1563
  %1596 = vmatmul.f32.gmra.mxu0 %v1569
  %v1597 = vpop.f32.mrf.mxu0
  %v1598 = vadd.f32 0.0, %v1597
  %1599 = vmatmul.f32.gmra.mxu0 %v1572
  %v1600 = vpop.f32.mrf.mxu0
  %v1601 = vadd.f32 0.0, %v1600
  %1602 = vmatmul.f32.gmra.mxu0 %v1575
  %v1603 = vpop.f32.mrf.mxu0
  %v1604 = vadd.f32 0.0, %v1603
  %1605 = vmatmul.f32.gmra.mxu0 %v1578
  %v1606 = vpop.f32.mrf.mxu0
  %v1607 = vadd.f32 0.0, %v1606
  %1608 = vdwg.mxu0
  %v1609 = vadd.f32 %v1554, %v1598
  %v1610 = vadd.f32 %v1555, %v1601
  %v1611 = vadd.f32 %v1556, %v1604
  %v1612 = vadd.f32 %v1557, %v1607
  %v1613 = vld [vmem:[%s5 + $0x1e0] sm:$0xff]
  %v1614 = vld [vmem:[%s5 + $0x1e8] sm:$0xff]
  %v1615 = vld [vmem:[%s5 + $0x1f0] sm:$0xff]
  %v1616 = vld [vmem:[%s5 + $0x1f8] sm:$0xff]
  %1617 = vrot.lane.b32.xlu0 %v798, 98
  %v1618 = vpop.permute.xlu0 %1617
  %1619 = vrot.lane.b32.xlu0 %v799, 98
  %v1620 = vpop.permute.xlu0 %1619
  %v1624 = vsel %vm191, %v1613, 0
  %v1627 = vsel %vm191, %v1614, 0
  %v1630 = vsel %vm191, %v1615, 0
  %v1633 = vsel %vm191, %v1616, 0
  %1635 = vmatpush.msra.mxu0 0.0
  %1636 = vmatpush.msra.mxu0 0.0
  %1637 = vmatpush.msra.mxu0 0.0
  %1638 = vmatpush.msra.mxu0 0.0
  %1639 = vmatpush.msra.mxu0 0.0
  %1640 = vmatpush.msra.mxu0 0.0
  %1641 = vmatpush.msra.mxu0 0.0
  %1642 = vmatpush.msra.mxu0 0.0
  %1643 = vmatpush.msra.mxu0 0.0
  %1644 = vmatpush.msra.mxu0 0.0
  %1645 = vmatpush.msra.mxu0 0.0
  %1646 = vmatpush.msra.mxu0 0.0
  %1647 = vmatpush.msra.mxu0 0.0
  %1648 = vmatpush.msra.mxu0 0.0
  %1649 = vmatpush.msra.mxu0 %v1620
  %1650 = vmatpush.msra.mxu0 %v1618
  %1651 = vmatmul.f32.gmra.mxu0 %v1624
  %v1652 = vpop.f32.mrf.mxu0
  %v1653 = vadd.f32 0.0, %v1652
  %1654 = vmatmul.f32.gmra.mxu0 %v1627
  %v1655 = vpop.f32.mrf.mxu0
  %v1656 = vadd.f32 0.0, %v1655
  %1657 = vmatmul.f32.gmra.mxu0 %v1630
  %v1658 = vpop.f32.mrf.mxu0
  %v1659 = vadd.f32 0.0, %v1658
  %1660 = vmatmul.f32.gmra.mxu0 %v1633
  %v1661 = vpop.f32.mrf.mxu0
  %v1662 = vadd.f32 0.0, %v1661
  %1663 = vdwg.mxu0
  %v1664 = vadd.f32 %v1609, %v1653
  %v1665 = vadd.f32 %v1610, %v1656
  %v1666 = vadd.f32 %v1611, %v1659
  %v1667 = vadd.f32 %v1612, %v1662
  %v1668 = vld [vmem:[%s6] sm:$0xff]
  %v1669 = vld [vmem:[%s6 + $0x8] sm:$0xff]
  %v1670 = vld [vmem:[%s6 + $0x10] sm:$0xff]
  %v1671 = vld [vmem:[%s6 + $0x18] sm:$0xff]
  %1673 = vset.pattern.permute.xlu0 0
  %1674 = vperm.xlu0 %1673, %v1668
  %v1675 = vpop.permute.xlu0 %1674
  %1678 = vset.pattern.permute.xlu0 0
  %1679 = vperm.xlu0 %1678, %v1669
  %v1680 = vpop.permute.xlu0 %1679
  %1683 = vset.pattern.permute.xlu0 0
  %1684 = vperm.xlu0 %1683, %v1670
  %v1685 = vpop.permute.xlu0 %1684
  %1688 = vset.pattern.permute.xlu0 0
  %1689 = vperm.xlu0 %1688, %v1671
  %v1690 = vpop.permute.xlu0 %1689
  %v1692 = vadd.f32 %v1664, %v1675
  %v1693 = vadd.f32 %v1665, %v1680
  %v1694 = vadd.f32 %v1666, %v1685
  %v1695 = vadd.f32 %v1667, %v1690
  %v1696 = vmax.f32 %v1692, 0.0
  %v1697 = vmax.f32 %v1693, 0.0
  %v1698 = vmax.f32 %v1694, 0.0
  %v1699 = vmax.f32 %v1695, 0.0
  %vm1700 = vcmask 15360
  %1701 = vst.msk [vmem:[%s7] sm:$0xff] %vm1700, %v1696
  %1702 = vst.msk [vmem:[%s7 + $0x8] sm:$0xff] %vm1700, %v1697
  %1703 = vst.msk [vmem:[%s7 + $0x10] sm:$0xff] %vm1700, %v1698
  %1704 = vst.msk [vmem:[%s7 + $0x18] sm:$0xff] %vm1700, %v1699
  // Predicated region
  $region30: #{proj_module_forward.1} parent=0 // pred_check
    _
  $region31: #{proj_module_forward.1} parent=0 // pred_check_branch
    %1706 = sbr.rel (0) target = $region33
  $region32: #{proj_module_forward.1} parent=0 // pred_region
    _
  $region33: #{proj_module_forward.1} parent=0 // pred_fallthru
    _
  // Predicated region
  $region34: #{proj_module_forward.1} parent=0 // pred_check
    _
  $region35: #{proj_module_forward.1} parent=0 // pred_check_branch
    %1708 = sbr.rel (0) target = $region37
  $region36: #{proj_module_forward.1} parent=0 // pred_region
    _
  $region37: #{proj_module_forward.1} parent=0 // pred_fallthru
    _

</llo_original>
